<compile_context>
chip_gen: v6e
topology: v6e:2x2x1
jax: 0.10.0
libtpu: 0.0.40
codegen_flags: <defaults>
</compile_context>

<pallas_src>
import functools

import jax
import jax.numpy as jnp
from jax.experimental import pallas as pl
from jax.experimental.pallas import tpu as pltpu


# ----------------------------------------------------------------------------
# Pallas kernel: grid = (batch blocks, time blocks); one invocation processes
# TB time steps for one batch block of BB (padded) rows.
# ----------------------------------------------------------------------------
def _rdqn_kernel(
    x_ref,       # (TB*BB, S)   time-major flattened input rows
    w1_ref,      # (S, H)
    b1_ref,      # (1, H)
    wih_ref,     # (H, 4H)
    whh_ref,     # (H, 4H)
    bg_ref,      # (1, 4H)      pre-folded b_ih + b_hh
    w2_ref,      # (H, Ap)      lane-dense (zero-padded) fc2 weight
    b2_ref,      # (1, Ap)
    h0_ref,      # (BB, H)
    c0_ref,      # (BB, H)
    q_ref,       # (TB*BB, Ap)  lane-dense q output block
    h_out_ref,   # (BB, H)      resident recurrent carry / final hidden state
    c_out_ref,   # (BB, H)      resident recurrent carry / final cell state
    gx_s,        # VMEM (TB*BB, 4H) f32  batched input projection slab
    h_slab_s,    # VMEM (TB*BB, H)  f32  per-step hidden states (batched fc2)
):
    t_blk = pl.program_id(1)
    bb, hidden = h0_ref.shape
    rows = x_ref.shape[0]
    tb = rows // bb
    cdt = wih_ref.dtype          # MXU operand dtype (f32 or bf16)

    # The h_out/c_out output blocks have a constant index along the time axis,
    # so they stay resident in VMEM across all time blocks of this batch block
    # and serve as the recurrent carry (written back to HBM once at the end).
    @pl.when(t_blk == 0)
    def _():
        h_out_ref[...] = h0_ref[...].astype(h_out_ref.dtype)
        c_out_ref[...] = c0_ref[...].astype(c_out_ref.dtype)

    # ---- Block-batched non-recurrent work: fc1 + ReLU + input projection ----
    a1 = jnp.dot(x_ref[...].astype(cdt), w1_ref[...],
                 preferred_element_type=jnp.float32) + b1_ref[...]
    a1 = jnp.maximum(a1, 0.0)
    gx_s[...] = jnp.dot(a1.astype(cdt), wih_ref[...],
                        preferred_element_type=jnp.float32) + bg_ref[...]

    # ---- Serial recurrence: only h @ W_hh + elementwise per step ------------
    whh = whh_ref[...]

    def step(s, carry):
        h, c = carry
        off = pl.multiple_of(s * bb, bb)
        gates = gx_s[pl.ds(off, bb), :] + jnp.dot(
            h.astype(cdt), whh, preferred_element_type=jnp.float32)
        i_g = jax.nn.sigmoid(gates[:, 0 * hidden:1 * hidden])
        f_g = jax.nn.sigmoid(gates[:, 1 * hidden:2 * hidden])
        g_g = jnp.tanh(gates[:, 2 * hidden:3 * hidden])
        o_g = jax.nn.sigmoid(gates[:, 3 * hidden:4 * hidden])
        c_new = f_g * c + i_g * g_g
        h_new = o_g * jnp.tanh(c_new)
        h_slab_s[pl.ds(off, bb), :] = h_new
        return (h_new, c_new)

    # Capped unroll: keeps LLO scheduling visibility without blowing the
    # 64-vreg file when TB is large.
    unroll = tb if tb <= 8 else max(d for d in (8, 4, 2, 1) if tb % d == 0)
    h_fin, c_fin = jax.lax.fori_loop(
        0, tb, step, (h_out_ref[...], c_out_ref[...]), unroll=unroll)

    # Write the carry unconditionally once per block (writeback to HBM only
    # happens when the output block index changes / at the end of the grid).
    h_out_ref[...] = h_fin
    c_out_ref[...] = c_fin

    # ---- Block-batched fc2 on the accumulated hidden slab (lane-dense) ------
    q_ref[...] = (jnp.dot(h_slab_s[...].astype(cdt), w2_ref[...],
                          preferred_element_type=jnp.float32)
                  + b2_ref[...]).astype(q_ref.dtype)


# ----------------------------------------------------------------------------
# Block-size selection: biggest time block whose f32 slabs stay inside a
# conservative VMEM budget (v7x only has 64 MiB total) while filling MXU rows.
# ----------------------------------------------------------------------------
def _pick_time_block(t, bb, hidden, slab_budget_bytes=24 << 20, max_rows=2048):
    best = 1
    for tb in range(1, t + 1):
        if t % tb != 0:
            continue
        rows = tb * bb
        slab_bytes = rows * 5 * hidden * 4   # gx (4H) + h (H) slabs, f32
        if slab_bytes <= slab_budget_bytes and rows <= max_rows:
            best = tb
    return best


# ----------------------------------------------------------------------------
# Wrapper (PyTorch convention: x (B, T, S); hidden = (h0, c0), each (1, B, H)).
# Returns (q_values (B, T, A), (h, c)).
# ----------------------------------------------------------------------------
@functools.partial(
    jax.jit, static_argnames=("time_block", "batch_block", "weight_dtype"))
def rdqn_forward(x, hidden, params, time_block=None, batch_block=None,
                 weight_dtype=jnp.float32):
    h0, c0 = hidden          # (1, B, H) each
    h0 = h0[0]               # (B, H)
    c0 = c0[0]               # (B, H)

    B, T, S = x.shape
    H = params["w1"].shape[1]
    A = params["w2"].shape[1]
    Ap = ((A + 127) // 128) * 128        # lane-dense q width

    Bp = max(8, ((B + 7) // 8) * 8)      # pad batch to a sublane multiple
    BB = batch_block if batch_block is not None else Bp
    if BB % 8 != 0 or Bp % BB != 0:
        raise ValueError(f"batch_block {BB} must be a multiple of 8 dividing "
                         f"padded batch {Bp}")
    nbb = Bp // BB

    TB = time_block if time_block is not None else _pick_time_block(T, BB, H)
    if T % TB != 0:
        raise ValueError(f"time_block {TB} must divide sequence length {T}")

    if Bp != B:
        x = jnp.pad(x, ((0, Bp - B), (0, 0), (0, 0)))
        h0 = jnp.pad(h0, ((0, Bp - B), (0, 0)))
        c0 = jnp.pad(c0, ((0, Bp - B), (0, 0)))

    wdt = weight_dtype
    w1 = params["w1"].astype(wdt)
    w_ih = params["w_ih"].astype(wdt)
    w_hh = params["w_hh"].astype(wdt)
    # Lane-dense fc2: zero-pad the action dim to Ap (>=128).
    w2p = jnp.pad(params["w2"], ((0, 0), (0, Ap - A))).astype(wdt)
    b2p = jnp.pad(params["b2"], ((0, 0), (0, Ap - A)))
    # Fold the two LSTM biases once in the wrapper (kept in f32).
    b_gate = params["b_ih"] + params["b_hh"]

    # Pre-flatten x into (batch_block, time-major rows, S): no in-kernel
    # reshape / relayout of a narrow-last-dim block.
    x_blk = (x.reshape(nbb, BB, T, S)
              .transpose(0, 2, 1, 3)
              .reshape(nbb, T * BB, S))
    h0_blk = h0.reshape(nbb, BB, H)
    c0_blk = c0.reshape(nbb, BB, H)

    # Grid-invariant weights: single-buffered (their block index never
    # changes), halving their VMEM footprint.
    def const_spec(shape):
        nd = len(shape)
        return pl.BlockSpec(shape, lambda j, i: (0,) * nd,
                            pipeline_mode=pl.Buffered(1))

    q_flat, h_out, c_out = pl.pallas_call(
        _rdqn_kernel,
        out_shape=(
            jax.ShapeDtypeStruct((nbb, T * BB, Ap), jnp.float32),
            jax.ShapeDtypeStruct((nbb, BB, H), jnp.float32),
            jax.ShapeDtypeStruct((nbb, BB, H), jnp.float32),
        ),
        grid_spec=pltpu.PrefetchScalarGridSpec(
            num_scalar_prefetch=0,
            grid=(nbb, T // TB),
            in_specs=[
                pl.BlockSpec((None, TB * BB, S), lambda j, i: (j, i, 0)),  # x
                const_spec((S, H)),                                        # w1
                const_spec((1, H)),                                        # b1
                const_spec((H, 4 * H)),                                    # w_ih
                const_spec((H, 4 * H)),                                    # w_hh
                const_spec((1, 4 * H)),                                    # b_gate
                const_spec((H, Ap)),                                       # w2 (padded)
                const_spec((1, Ap)),                                       # b2 (padded)
                pl.BlockSpec((None, BB, H), lambda j, i: (j, 0, 0)),       # h0
                pl.BlockSpec((None, BB, H), lambda j, i: (j, 0, 0)),       # c0
            ],
            out_specs=[
                pl.BlockSpec((None, TB * BB, Ap), lambda j, i: (j, i, 0)), # q
                pl.BlockSpec((None, BB, H), lambda j, i: (j, 0, 0)),       # h_out
                pl.BlockSpec((None, BB, H), lambda j, i: (j, 0, 0)),       # c_out
            ],
            scratch_shapes=[
                pltpu.VMEM((TB * BB, 4 * H), jnp.float32),   # gx slab
                pltpu.VMEM((TB * BB, H), jnp.float32),       # hidden slab
            ],
        ),
        compiler_params=pltpu.CompilerParams(
            # batch blocks are independent (megacore-shardable on v7x);
            # the time axis carries the recurrence.
            dimension_semantics=("parallel", "arbitrary"),
            vmem_limit_bytes=48 * 1024 * 1024,
        ),
    )(
        x_blk,
        w1, params["b1"],
        w_ih, w_hh, b_gate,
        w2p, b2p,
        h0_blk, c0_blk,
    )

    # Un-flatten, drop batch padding and the lane padding of the action dim.
    q = (q_flat.reshape(nbb, T, BB, Ap)
               .transpose(0, 2, 1, 3)
               .reshape(Bp, T, Ap))[:B, :, :A]
    h_fin = h_out.reshape(Bp, H)[:B][None]
    c_fin = c_out.reshape(Bp, H)[:B][None]
    return q, (h_fin, c_fin)


# ----------------------------------------------------------------------------
# Pure-JAX reference (mirrors the PyTorch forward) for correctness checks.
# ----------------------------------------------------------------------------
def rdqn_reference(x, hidden, params):
    h, c = hidden[0][0], hidden[1][0]
    H = params["w1"].shape[1]
    a1 = jax.nn.relu(x @ params["w1"] + params["b1"][0])  # (B, T, H)

    def step(carry, x_t):
        h, c = carry
        gates = (x_t @ params["w_ih"] + params["b_ih"][0]
                 + h @ params["w_hh"] + params["b_hh"][0])
        i = jax.nn.sigmoid(gates[:, 0 * H:1 * H])
        f = jax.nn.sigmoid(gates[:, 1 * H:2 * H])
        g = jnp.tanh(gates[:, 2 * H:3 * H])
        o = jax.nn.sigmoid(gates[:, 3 * H:4 * H])
        c = f * c + i * g
        h = o * jnp.tanh(c)
        return (h, c), h

    (h, c), outs = jax.lax.scan(step, (h, c), jnp.transpose(a1, (1, 0, 2)))
    outs = jnp.transpose(outs, (1, 0, 2))  # (B, T, H)
    q = outs @ params["w2"] + params["b2"][0]
    return q, (h[None], c[None])


def init_params(key, state_size, action_size, hidden_size):
    ks = jax.random.split(key, 9)
    u = lambda k, shape, bound: jax.random.uniform(
        k, shape, jnp.float32, -bound, bound)
    b1 = 1.0 / jnp.sqrt(state_size)
    bh = 1.0 / jnp.sqrt(hidden_size)
    return {
        # fc1: stored transposed relative to torch (kernel does x @ w)
        "w1": u(ks[0], (state_size, hidden_size), b1),
        "b1": u(ks[1], (1, hidden_size), b1),
        # LSTM layer 0 weights, transposed: (in, 4H), gate order i,f,g,o
        "w_ih": u(ks[2], (hidden_size, 4 * hidden_size), bh),
        "b_ih": u(ks[3], (1, 4 * hidden_size), bh),
        "w_hh": u(ks[4], (hidden_size, 4 * hidden_size), bh),
        "b_hh": u(ks[5], (1, 4 * hidden_size), bh),
        # fc2
        "w2": u(ks[6], (hidden_size, action_size), bh),
        "b2": u(ks[7], (1, action_size), bh),
    }


if __name__ == "__main__":
    # Module defaults: hidden_size=128 (lane-aligned), num_layers=1.
    state_size, action_size, hidden_size = 16, 4, 128
    batch, seq = 2, 8

    key = jax.random.PRNGKey(0)
    k_params, k_x = jax.random.split(key)
    params = init_params(k_params, state_size, action_size, hidden_size)

    x = jax.random.normal(k_x, (batch, seq, state_size), jnp.float32)
    h0 = jnp.zeros((1, batch, hidden_size), jnp.float32)
    c0 = jnp.zeros((1, batch, hidden_size), jnp.float32)

    q_ref, (h_ref, c_ref) = rdqn_reference(x, (h0, c0), params)

    # f32 weights: tight check against the pure-JAX (PyTorch-equivalent) ref.
    q, (h, c) = rdqn_forward(x, (h0, c0), params)
    jax.block_until_ready((q, h, c))
    assert q.shape == (batch, seq, action_size)
    assert h.shape == (1, batch, hidden_size) and c.shape == (1, batch, hidden_size)
    assert jnp.allclose(q, q_ref, atol=1e-4, rtol=1e-4)
    assert jnp.allclose(h, h_ref, atol=1e-4, rtol=1e-4)
    assert jnp.allclose(c, c_ref, atol=1e-4, rtol=1e-4)

    # bf16 weights (production MXU path, f32 accumulate / f32 gate math):
    # loose check against the f32 reference.
    q16, _ = rdqn_forward(x, (h0, c0), params, weight_dtype=jnp.bfloat16)
    jax.block_until_ready(q16)
    assert jnp.allclose(q16, q_ref, atol=5e-2, rtol=5e-2)

    print("KERNEL_OK")
</pallas_src>

<mosaic_0001>
module attributes {stable_mosaic.version = 11 : i64} {
  func.func @_rdqn_kernel(%arg0: i32, %arg1: i32, %arg2: memref<1x64x16xf32, #tpu.memory_space<vmem>>, %arg3: memref<16x128xf32, #tpu.memory_space<vmem>>, %arg4: memref<1x128xf32, #tpu.memory_space<vmem>>, %arg5: memref<128x512xf32, #tpu.memory_space<vmem>>, %arg6: memref<128x512xf32, #tpu.memory_space<vmem>>, %arg7: memref<1x512xf32, #tpu.memory_space<vmem>>, %arg8: memref<128x128xf32, #tpu.memory_space<vmem>>, %arg9: memref<1x128xf32, #tpu.memory_space<vmem>>, %arg10: memref<1x8x128xf32, #tpu.memory_space<vmem>>, %arg11: memref<1x8x128xf32, #tpu.memory_space<vmem>>, %arg12: memref<1x64x128xf32, #tpu.memory_space<vmem>>, %arg13: memref<1x8x128xf32, #tpu.memory_space<vmem>>, %arg14: memref<1x8x128xf32, #tpu.memory_space<vmem>>, %arg15: memref<64x512xf32, #tpu.memory_space<vmem>>, %arg16: memref<64x128xf32, #tpu.memory_space<vmem>>) attributes {dimension_semantics = [#tpu.dimension_semantics<parallel>, #tpu.dimension_semantics<arbitrary>], iteration_bounds = array<i64: 1, 1>, scalar_prefetch = 0 : i64, scratch_operands = 2 : i64, tpu.core_type = #tpu.core_type<tc>, window_params = [{transform_indices = @transform_0, window_bounds = array<i64: 1, 64, 16>}, {pipeline_mode = #tpu.pipeline_mode<synchronous>, transform_indices = @transform_1, window_bounds = array<i64: 16, 128>}, {pipeline_mode = #tpu.pipeline_mode<synchronous>, transform_indices = @transform_2, window_bounds = array<i64: 1, 128>}, {pipeline_mode = #tpu.pipeline_mode<synchronous>, transform_indices = @transform_3, window_bounds = array<i64: 128, 512>}, {pipeline_mode = #tpu.pipeline_mode<synchronous>, transform_indices = @transform_4, window_bounds = array<i64: 128, 512>}, {pipeline_mode = #tpu.pipeline_mode<synchronous>, transform_indices = @transform_5, window_bounds = array<i64: 1, 512>}, {pipeline_mode = #tpu.pipeline_mode<synchronous>, transform_indices = @transform_6, window_bounds = array<i64: 128, 128>}, {pipeline_mode = #tpu.pipeline_mode<synchronous>, transform_indices = @transform_7, window_bounds = array<i64: 1, 128>}, {transform_indices = @transform_8, window_bounds = array<i64: 1, 8, 128>}, {transform_indices = @transform_9, window_bounds = array<i64: 1, 8, 128>}, {transform_indices = @transform_10, window_bounds = array<i64: 1, 64, 128>}, {transform_indices = @transform_11, window_bounds = array<i64: 1, 8, 128>}, {transform_indices = @transform_12, window_bounds = array<i64: 1, 8, 128>}]} {
    %c0_i32 = arith.constant 0 : i32
    %0 = arith.cmpi eq, %arg1, %c0_i32 : i32
    %1 = arith.extui %0 : i1 to i32
    %c0_i32_0 = arith.constant 0 : i32
    %2 = arith.cmpi ne, %1, %c0_i32_0 : i32
    scf.if %2 {
      %c0_96 = arith.constant 0 : index
      %c0_97 = arith.constant 0 : index
      %c0_98 = arith.constant 0 : index
      %302 = vector.load %arg10[%c0_96, %c0_97, %c0_98] : memref<1x8x128xf32, #tpu.memory_space<vmem>>, vector<1x8x128xf32>
      %303 = vector.shape_cast %302 : vector<1x8x128xf32> to vector<8x128xf32>
      %c0_99 = arith.constant 0 : index
      %c0_100 = arith.constant 0 : index
      %c0_101 = arith.constant 0 : index
      %304 = vector.load %arg13[%c0_99, %c0_100, %c0_101] : memref<1x8x128xf32, #tpu.memory_space<vmem>>, vector<1x8x128xf32>
      %305 = vector.shape_cast %304 : vector<1x8x128xf32> to vector<8x128xf32>
      %306 = vector.shape_cast %303 : vector<8x128xf32> to vector<1x8x128xf32>
      tpu.vector_store %arg13[%c0_99, %c0_100, %c0_101], %306 {strides = array<i32>} : memref<1x8x128xf32, #tpu.memory_space<vmem>>, vector<1x8x128xf32>,
      %c0_102 = arith.constant 0 : index
      %c0_103 = arith.constant 0 : index
      %c0_104 = arith.constant 0 : index
      %307 = vector.load %arg11[%c0_102, %c0_103, %c0_104] : memref<1x8x128xf32, #tpu.memory_space<vmem>>, vector<1x8x128xf32>
      %308 = vector.shape_cast %307 : vector<1x8x128xf32> to vector<8x128xf32>
      %c0_105 = arith.constant 0 : index
      %c0_106 = arith.constant 0 : index
      %c0_107 = arith.constant 0 : index
      %309 = vector.load %arg14[%c0_105, %c0_106, %c0_107] : memref<1x8x128xf32, #tpu.memory_space<vmem>>, vector<1x8x128xf32>
      %310 = vector.shape_cast %309 : vector<1x8x128xf32> to vector<8x128xf32>
      %311 = vector.shape_cast %308 : vector<8x128xf32> to vector<1x8x128xf32>
      tpu.vector_store %arg14[%c0_105, %c0_106, %c0_107], %311 {strides = array<i32>} : memref<1x8x128xf32, #tpu.memory_space<vmem>>, vector<1x8x128xf32>,
    } else {
    }
    %c0 = arith.constant 0 : index
    %c0_1 = arith.constant 0 : index
    %c0_2 = arith.constant 0 : index
    %3 = vector.load %arg2[%c0, %c0_1, %c0_2] : memref<1x64x16xf32, #tpu.memory_space<vmem>>, vector<1x64x16xf32>
    %4 = vector.shape_cast %3 : vector<1x64x16xf32> to vector<64x16xf32>
    %c0_3 = arith.constant 0 : index
    %c0_4 = arith.constant 0 : index
    %5 = vector.load %arg3[%c0_3, %c0_4] : memref<16x128xf32, #tpu.memory_space<vmem>>, vector<16x128xf32>
    %cst = arith.constant dense<0.000000e+00> : vector<64x128xf32>
    %6 = tpu.matmul %4, %5, %cst {dimension_numbers = #tpu.dot_dimension_numbers<[1], [0], [0], [1], [0, 0, 1, 1], [], []>} : vector<64x16xf32>, vector<16x128xf32>, vector<64x128xf32> -> vector<64x128xf32>
    %c0_5 = arith.constant 0 : index
    %c0_6 = arith.constant 0 : index
    %7 = vector.load %arg4[%c0_5, %c0_6] : memref<1x128xf32, #tpu.memory_space<vmem>>, vector<1x128xf32>
    %8 = vector.broadcast %7 : vector<1x128xf32> to vector<64x128xf32>
    %9 = arith.addf %6, %8 : vector<64x128xf32>
    %cst_7 = arith.constant 0.000000e+00 : f32
    %10 = vector.broadcast %cst_7 : f32 to vector<64x128xf32>
    %11 = arith.maximumf %9, %10 : vector<64x128xf32>
    %c0_8 = arith.constant 0 : index
    %c0_9 = arith.constant 0 : index
    %12 = vector.load %arg5[%c0_8, %c0_9] : memref<128x512xf32, #tpu.memory_space<vmem>>, vector<128x512xf32>
    %cst_10 = arith.constant dense<0.000000e+00> : vector<64x512xf32>
    %13 = tpu.matmul %11, %12, %cst_10 {dimension_numbers = #tpu.dot_dimension_numbers<[1], [0], [0], [1], [0, 0, 1, 1], [], []>} : vector<64x128xf32>, vector<128x512xf32>, vector<64x512xf32> -> vector<64x512xf32>
    %c0_11 = arith.constant 0 : index
    %c0_12 = arith.constant 0 : index
    %14 = vector.load %arg7[%c0_11, %c0_12] : memref<1x512xf32, #tpu.memory_space<vmem>>, vector<1x512xf32>
    %15 = vector.broadcast %14 : vector<1x512xf32> to vector<64x512xf32>
    %16 = arith.addf %13, %15 : vector<64x512xf32>
    %c0_13 = arith.constant 0 : index
    %c0_14 = arith.constant 0 : index
    %17 = vector.load %arg15[%c0_13, %c0_14] : memref<64x512xf32, #tpu.memory_space<vmem>>, vector<64x512xf32>
    tpu.vector_store %arg15[%c0_13, %c0_14], %16 {strides = array<i32>} : memref<64x512xf32, #tpu.memory_space<vmem>>, vector<64x512xf32>,
    %c0_15 = arith.constant 0 : index
    %c0_16 = arith.constant 0 : index
    %18 = vector.load %arg6[%c0_15, %c0_16] : memref<128x512xf32, #tpu.memory_space<vmem>>, vector<128x512xf32>
    %c0_17 = arith.constant 0 : index
    %c0_18 = arith.constant 0 : index
    %c0_19 = arith.constant 0 : index
    %19 = vector.load %arg13[%c0_17, %c0_18, %c0_19] : memref<1x8x128xf32, #tpu.memory_space<vmem>>, vector<1x8x128xf32>
    %20 = vector.shape_cast %19 : vector<1x8x128xf32> to vector<8x128xf32>
    %c0_20 = arith.constant 0 : index
    %c0_21 = arith.constant 0 : index
    %c0_22 = arith.constant 0 : index
    %21 = vector.load %arg14[%c0_20, %c0_21, %c0_22] : memref<1x8x128xf32, #tpu.memory_space<vmem>>, vector<1x8x128xf32>
    %22 = vector.shape_cast %21 : vector<1x8x128xf32> to vector<8x128xf32>
    %c0_i32_23 = arith.constant 0 : i32
    %c8_i32 = arith.constant 8 : i32
    %23 = arith.muli %c0_i32_23, %c8_i32 : i32
    %24 = tpu.assume_multiple %23, 8 : i32
    %25 = arith.index_cast %24 : i32 to index
    %c0_24 = arith.constant 0 : index
    %26 = vector.load %arg15[%25, %c0_24] : memref<64x512xf32, #tpu.memory_space<vmem>>, vector<8x512xf32>
    %cst_25 = arith.constant dense<0.000000e+00> : vector<8x512xf32>
    %27 = tpu.matmul %20, %18, %cst_25 {dimension_numbers = #tpu.dot_dimension_numbers<[1], [0], [0], [1], [0, 0, 1, 1], [], []>} : vector<8x128xf32>, vector<128x512xf32>, vector<8x512xf32> -> vector<8x512xf32>
    %28 = arith.addf %26, %27 : vector<8x512xf32>
    %29 = vector.extract_strided_slice %28 {offsets = [0, 0], sizes = [8, 128], strides = [1, 1]} : vector<8x512xf32> to vector<8x128xf32>
    %30 = arith.negf %29 : vector<8x128xf32>
    %31 = math.exp %30 : vector<8x128xf32>
    %cst_26 = arith.constant 1.000000e+00 : f32
    %32 = vector.broadcast %cst_26 : f32 to vector<8x128xf32>
    %33 = arith.addf %32, %31 : vector<8x128xf32>
    %34 = arith.divf %32, %33 : vector<8x128xf32>
    %35 = vector.extract_strided_slice %28 {offsets = [0, 128], sizes = [8, 128], strides = [1, 1]} : vector<8x512xf32> to vector<8x128xf32>
    %36 = arith.negf %35 : vector<8x128xf32>
    %37 = math.exp %36 : vector<8x128xf32>
    %cst_27 = arith.constant 1.000000e+00 : f32
    %38 = vector.broadcast %cst_27 : f32 to vector<8x128xf32>
    %39 = arith.addf %38, %37 : vector<8x128xf32>
    %40 = arith.divf %38, %39 : vector<8x128xf32>
    %41 = vector.extract_strided_slice %28 {offsets = [0, 256], sizes = [8, 128], strides = [1, 1]} : vector<8x512xf32> to vector<8x128xf32>
    %42 = math.tanh %41 : vector<8x128xf32>
    %43 = vector.extract_strided_slice %28 {offsets = [0, 384], sizes = [8, 128], strides = [1, 1]} : vector<8x512xf32> to vector<8x128xf32>
    %44 = arith.negf %43 : vector<8x128xf32>
    %45 = math.exp %44 : vector<8x128xf32>
    %cst_28 = arith.constant 1.000000e+00 : f32
    %46 = vector.broadcast %cst_28 : f32 to vector<8x128xf32>
    %47 = arith.addf %46, %45 : vector<8x128xf32>
    %48 = arith.divf %46, %47 : vector<8x128xf32>
    %49 = arith.mulf %40, %22 : vector<8x128xf32>
    %50 = arith.mulf %34, %42 : vector<8x128xf32>
    %51 = arith.addf %49, %50 : vector<8x128xf32>
    %52 = math.tanh %51 : vector<8x128xf32>
    %53 = arith.mulf %48, %52 : vector<8x128xf32>
    %54 = arith.index_cast %24 : i32 to index
    %c0_29 = arith.constant 0 : index
    %55 = vector.load %arg16[%54, %c0_29] : memref<64x128xf32, #tpu.memory_space<vmem>>, vector<8x128xf32>
    tpu.vector_store %arg16[%54, %c0_29], %53 {strides = array<i32>} : memref<64x128xf32, #tpu.memory_space<vmem>>, vector<8x128xf32>,
    %c1_i32 = arith.constant 1 : i32
    %c8_i32_30 = arith.constant 8 : i32
    %56 = arith.muli %c1_i32, %c8_i32_30 : i32
    %57 = tpu.assume_multiple %56, 8 : i32
    %58 = arith.index_cast %57 : i32 to index
    %c0_31 = arith.constant 0 : index
    %59 = vector.load %arg15[%58, %c0_31] : memref<64x512xf32, #tpu.memory_space<vmem>>, vector<8x512xf32>
    %cst_32 = arith.constant dense<0.000000e+00> : vector<8x512xf32>
    %60 = tpu.matmul %53, %18, %cst_32 {dimension_numbers = #tpu.dot_dimension_numbers<[1], [0], [0], [1], [0, 0, 1, 1], [], []>} : vector<8x128xf32>, vector<128x512xf32>, vector<8x512xf32> -> vector<8x512xf32>
    %61 = arith.addf %59, %60 : vector<8x512xf32>
    %62 = vector.extract_strided_slice %61 {offsets = [0, 0], sizes = [8, 128], strides = [1, 1]} : vector<8x512xf32> to vector<8x128xf32>
    %63 = arith.negf %62 : vector<8x128xf32>
    %64 = math.exp %63 : vector<8x128xf32>
    %cst_33 = arith.constant 1.000000e+00 : f32
    %65 = vector.broadcast %cst_33 : f32 to vector<8x128xf32>
    %66 = arith.addf %65, %64 : vector<8x128xf32>
    %67 = arith.divf %65, %66 : vector<8x128xf32>
    %68 = vector.extract_strided_slice %61 {offsets = [0, 128], sizes = [8, 128], strides = [1, 1]} : vector<8x512xf32> to vector<8x128xf32>
    %69 = arith.negf %68 : vector<8x128xf32>
    %70 = math.exp %69 : vector<8x128xf32>
    %cst_34 = arith.constant 1.000000e+00 : f32
    %71 = vector.broadcast %cst_34 : f32 to vector<8x128xf32>
    %72 = arith.addf %71, %70 : vector<8x128xf32>
    %73 = arith.divf %71, %72 : vector<8x128xf32>
    %74 = vector.extract_strided_slice %61 {offsets = [0, 256], sizes = [8, 128], strides = [1, 1]} : vector<8x512xf32> to vector<8x128xf32>
    %75 = math.tanh %74 : vector<8x128xf32>
    %76 = vector.extract_strided_slice %61 {offsets = [0, 384], sizes = [8, 128], strides = [1, 1]} : vector<8x512xf32> to vector<8x128xf32>
    %77 = arith.negf %76 : vector<8x128xf32>
    %78 = math.exp %77 : vector<8x128xf32>
    %cst_35 = arith.constant 1.000000e+00 : f32
    %79 = vector.broadcast %cst_35 : f32 to vector<8x128xf32>
    %80 = arith.addf %79, %78 : vector<8x128xf32>
    %81 = arith.divf %79, %80 : vector<8x128xf32>
    %82 = arith.mulf %73, %51 : vector<8x128xf32>
    %83 = arith.mulf %67, %75 : vector<8x128xf32>
    %84 = arith.addf %82, %83 : vector<8x128xf32>
    %85 = math.tanh %84 : vector<8x128xf32>
    %86 = arith.mulf %81, %85 : vector<8x128xf32>
    %87 = arith.index_cast %57 : i32 to index
    %c0_36 = arith.constant 0 : index
    %88 = vector.load %arg16[%87, %c0_36] : memref<64x128xf32, #tpu.memory_space<vmem>>, vector<8x128xf32>
    tpu.vector_store %arg16[%87, %c0_36], %86 {strides = array<i32>} : memref<64x128xf32, #tpu.memory_space<vmem>>, vector<8x128xf32>,
    %c2_i32 = arith.constant 2 : i32
    %c8_i32_37 = arith.constant 8 : i32
    %89 = arith.muli %c2_i32, %c8_i32_37 : i32
    %90 = tpu.assume_multiple %89, 8 : i32
    %91 = arith.index_cast %90 : i32 to index
    %c0_38 = arith.constant 0 : index
    %92 = vector.load %arg15[%91, %c0_38] : memref<64x512xf32, #tpu.memory_space<vmem>>, vector<8x512xf32>
    %cst_39 = arith.constant dense<0.000000e+00> : vector<8x512xf32>
    %93 = tpu.matmul %86, %18, %cst_39 {dimension_numbers = #tpu.dot_dimension_numbers<[1], [0], [0], [1], [0, 0, 1, 1], [], []>} : vector<8x128xf32>, vector<128x512xf32>, vector<8x512xf32> -> vector<8x512xf32>
    %94 = arith.addf %92, %93 : vector<8x512xf32>
    %95 = vector.extract_strided_slice %94 {offsets = [0, 0], sizes = [8, 128], strides = [1, 1]} : vector<8x512xf32> to vector<8x128xf32>
    %96 = arith.negf %95 : vector<8x128xf32>
    %97 = math.exp %96 : vector<8x128xf32>
    %cst_40 = arith.constant 1.000000e+00 : f32
    %98 = vector.broadcast %cst_40 : f32 to vector<8x128xf32>
    %99 = arith.addf %98, %97 : vector<8x128xf32>
    %100 = arith.divf %98, %99 : vector<8x128xf32>
    %101 = vector.extract_strided_slice %94 {offsets = [0, 128], sizes = [8, 128], strides = [1, 1]} : vector<8x512xf32> to vector<8x128xf32>
    %102 = arith.negf %101 : vector<8x128xf32>
    %103 = math.exp %102 : vector<8x128xf32>
    %cst_41 = arith.constant 1.000000e+00 : f32
    %104 = vector.broadcast %cst_41 : f32 to vector<8x128xf32>
    %105 = arith.addf %104, %103 : vector<8x128xf32>
    %106 = arith.divf %104, %105 : vector<8x128xf32>
    %107 = vector.extract_strided_slice %94 {offsets = [0, 256], sizes = [8, 128], strides = [1, 1]} : vector<8x512xf32> to vector<8x128xf32>
    %108 = math.tanh %107 : vector<8x128xf32>
    %109 = vector.extract_strided_slice %94 {offsets = [0, 384], sizes = [8, 128], strides = [1, 1]} : vector<8x512xf32> to vector<8x128xf32>
    %110 = arith.negf %109 : vector<8x128xf32>
    %111 = math.exp %110 : vector<8x128xf32>
    %cst_42 = arith.constant 1.000000e+00 : f32
    %112 = vector.broadcast %cst_42 : f32 to vector<8x128xf32>
    %113 = arith.addf %112, %111 : vector<8x128xf32>
    %114 = arith.divf %112, %113 : vector<8x128xf32>
    %115 = arith.mulf %106, %84 : vector<8x128xf32>
    %116 = arith.mulf %100, %108 : vector<8x128xf32>
    %117 = arith.addf %115, %116 : vector<8x128xf32>
    %118 = math.tanh %117 : vector<8x128xf32>
    %119 = arith.mulf %114, %118 : vector<8x128xf32>
    %120 = arith.index_cast %90 : i32 to index
    %c0_43 = arith.constant 0 : index
    %121 = vector.load %arg16[%120, %c0_43] : memref<64x128xf32, #tpu.memory_space<vmem>>, vector<8x128xf32>
    tpu.vector_store %arg16[%120, %c0_43], %119 {strides = array<i32>} : memref<64x128xf32, #tpu.memory_space<vmem>>, vector<8x128xf32>,
    %c3_i32 = arith.constant 3 : i32
    %c8_i32_44 = arith.constant 8 : i32
    %122 = arith.muli %c3_i32, %c8_i32_44 : i32
    %123 = tpu.assume_multiple %122, 8 : i32
    %124 = arith.index_cast %123 : i32 to index
    %c0_45 = arith.constant 0 : index
    %125 = vector.load %arg15[%124, %c0_45] : memref<64x512xf32, #tpu.memory_space<vmem>>, vector<8x512xf32>
    %cst_46 = arith.constant dense<0.000000e+00> : vector<8x512xf32>
    %126 = tpu.matmul %119, %18, %cst_46 {dimension_numbers = #tpu.dot_dimension_numbers<[1], [0], [0], [1], [0, 0, 1, 1], [], []>} : vector<8x128xf32>, vector<128x512xf32>, vector<8x512xf32> -> vector<8x512xf32>
    %127 = arith.addf %125, %126 : vector<8x512xf32>
    %128 = vector.extract_strided_slice %127 {offsets = [0, 0], sizes = [8, 128], strides = [1, 1]} : vector<8x512xf32> to vector<8x128xf32>
    %129 = arith.negf %128 : vector<8x128xf32>
    %130 = math.exp %129 : vector<8x128xf32>
    %cst_47 = arith.constant 1.000000e+00 : f32
    %131 = vector.broadcast %cst_47 : f32 to vector<8x128xf32>
    %132 = arith.addf %131, %130 : vector<8x128xf32>
    %133 = arith.divf %131, %132 : vector<8x128xf32>
    %134 = vector.extract_strided_slice %127 {offsets = [0, 128], sizes = [8, 128], strides = [1, 1]} : vector<8x512xf32> to vector<8x128xf32>
    %135 = arith.negf %134 : vector<8x128xf32>
    %136 = math.exp %135 : vector<8x128xf32>
    %cst_48 = arith.constant 1.000000e+00 : f32
    %137 = vector.broadcast %cst_48 : f32 to vector<8x128xf32>
    %138 = arith.addf %137, %136 : vector<8x128xf32>
    %139 = arith.divf %137, %138 : vector<8x128xf32>
    %140 = vector.extract_strided_slice %127 {offsets = [0, 256], sizes = [8, 128], strides = [1, 1]} : vector<8x512xf32> to vector<8x128xf32>
    %141 = math.tanh %140 : vector<8x128xf32>
    %142 = vector.extract_strided_slice %127 {offsets = [0, 384], sizes = [8, 128], strides = [1, 1]} : vector<8x512xf32> to vector<8x128xf32>
    %143 = arith.negf %142 : vector<8x128xf32>
    %144 = math.exp %143 : vector<8x128xf32>
    %cst_49 = arith.constant 1.000000e+00 : f32
    %145 = vector.broadcast %cst_49 : f32 to vector<8x128xf32>
    %146 = arith.addf %145, %144 : vector<8x128xf32>
    %147 = arith.divf %145, %146 : vector<8x128xf32>
    %148 = arith.mulf %139, %117 : vector<8x128xf32>
    %149 = arith.mulf %133, %141 : vector<8x128xf32>
    %150 = arith.addf %148, %149 : vector<8x128xf32>
    %151 = math.tanh %150 : vector<8x128xf32>
    %152 = arith.mulf %147, %151 : vector<8x128xf32>
    %153 = arith.index_cast %123 : i32 to index
    %c0_50 = arith.constant 0 : index
    %154 = vector.load %arg16[%153, %c0_50] : memref<64x128xf32, #tpu.memory_space<vmem>>, vector<8x128xf32>
    tpu.vector_store %arg16[%153, %c0_50], %152 {strides = array<i32>} : memref<64x128xf32, #tpu.memory_space<vmem>>, vector<8x128xf32>,
    %c4_i32 = arith.constant 4 : i32
    %c8_i32_51 = arith.constant 8 : i32
    %155 = arith.muli %c4_i32, %c8_i32_51 : i32
    %156 = tpu.assume_multiple %155, 8 : i32
    %157 = arith.index_cast %156 : i32 to index
    %c0_52 = arith.constant 0 : index
    %158 = vector.load %arg15[%157, %c0_52] : memref<64x512xf32, #tpu.memory_space<vmem>>, vector<8x512xf32>
    %cst_53 = arith.constant dense<0.000000e+00> : vector<8x512xf32>
    %159 = tpu.matmul %152, %18, %cst_53 {dimension_numbers = #tpu.dot_dimension_numbers<[1], [0], [0], [1], [0, 0, 1, 1], [], []>} : vector<8x128xf32>, vector<128x512xf32>, vector<8x512xf32> -> vector<8x512xf32>
    %160 = arith.addf %158, %159 : vector<8x512xf32>
    %161 = vector.extract_strided_slice %160 {offsets = [0, 0], sizes = [8, 128], strides = [1, 1]} : vector<8x512xf32> to vector<8x128xf32>
    %162 = arith.negf %161 : vector<8x128xf32>
    %163 = math.exp %162 : vector<8x128xf32>
    %cst_54 = arith.constant 1.000000e+00 : f32
    %164 = vector.broadcast %cst_54 : f32 to vector<8x128xf32>
    %165 = arith.addf %164, %163 : vector<8x128xf32>
    %166 = arith.divf %164, %165 : vector<8x128xf32>
    %167 = vector.extract_strided_slice %160 {offsets = [0, 128], sizes = [8, 128], strides = [1, 1]} : vector<8x512xf32> to vector<8x128xf32>
    %168 = arith.negf %167 : vector<8x128xf32>
    %169 = math.exp %168 : vector<8x128xf32>
    %cst_55 = arith.constant 1.000000e+00 : f32
    %170 = vector.broadcast %cst_55 : f32 to vector<8x128xf32>
    %171 = arith.addf %170, %169 : vector<8x128xf32>
    %172 = arith.divf %170, %171 : vector<8x128xf32>
    %173 = vector.extract_strided_slice %160 {offsets = [0, 256], sizes = [8, 128], strides = [1, 1]} : vector<8x512xf32> to vector<8x128xf32>
    %174 = math.tanh %173 : vector<8x128xf32>
    %175 = vector.extract_strided_slice %160 {offsets = [0, 384], sizes = [8, 128], strides = [1, 1]} : vector<8x512xf32> to vector<8x128xf32>
    %176 = arith.negf %175 : vector<8x128xf32>
    %177 = math.exp %176 : vector<8x128xf32>
    %cst_56 = arith.constant 1.000000e+00 : f32
    %178 = vector.broadcast %cst_56 : f32 to vector<8x128xf32>
    %179 = arith.addf %178, %177 : vector<8x128xf32>
    %180 = arith.divf %178, %179 : vector<8x128xf32>
    %181 = arith.mulf %172, %150 : vector<8x128xf32>
    %182 = arith.mulf %166, %174 : vector<8x128xf32>
    %183 = arith.addf %181, %182 : vector<8x128xf32>
    %184 = math.tanh %183 : vector<8x128xf32>
    %185 = arith.mulf %180, %184 : vector<8x128xf32>
    %186 = arith.index_cast %156 : i32 to index
    %c0_57 = arith.constant 0 : index
    %187 = vector.load %arg16[%186, %c0_57] : memref<64x128xf32, #tpu.memory_space<vmem>>, vector<8x128xf32>
    tpu.vector_store %arg16[%186, %c0_57], %185 {strides = array<i32>} : memref<64x128xf32, #tpu.memory_space<vmem>>, vector<8x128xf32>,
    %c5_i32 = arith.constant 5 : i32
    %c8_i32_58 = arith.constant 8 : i32
    %188 = arith.muli %c5_i32, %c8_i32_58 : i32
    %189 = tpu.assume_multiple %188, 8 : i32
    %190 = arith.index_cast %189 : i32 to index
    %c0_59 = arith.constant 0 : index
    %191 = vector.load %arg15[%190, %c0_59] : memref<64x512xf32, #tpu.memory_space<vmem>>, vector<8x512xf32>
    %cst_60 = arith.constant dense<0.000000e+00> : vector<8x512xf32>
    %192 = tpu.matmul %185, %18, %cst_60 {dimension_numbers = #tpu.dot_dimension_numbers<[1], [0], [0], [1], [0, 0, 1, 1], [], []>} : vector<8x128xf32>, vector<128x512xf32>, vector<8x512xf32> -> vector<8x512xf32>
    %193 = arith.addf %191, %192 : vector<8x512xf32>
    %194 = vector.extract_strided_slice %193 {offsets = [0, 0], sizes = [8, 128], strides = [1, 1]} : vector<8x512xf32> to vector<8x128xf32>
    %195 = arith.negf %194 : vector<8x128xf32>
    %196 = math.exp %195 : vector<8x128xf32>
    %cst_61 = arith.constant 1.000000e+00 : f32
    %197 = vector.broadcast %cst_61 : f32 to vector<8x128xf32>
    %198 = arith.addf %197, %196 : vector<8x128xf32>
    %199 = arith.divf %197, %198 : vector<8x128xf32>
    %200 = vector.extract_strided_slice %193 {offsets = [0, 128], sizes = [8, 128], strides = [1, 1]} : vector<8x512xf32> to vector<8x128xf32>
    %201 = arith.negf %200 : vector<8x128xf32>
    %202 = math.exp %201 : vector<8x128xf32>
    %cst_62 = arith.constant 1.000000e+00 : f32
    %203 = vector.broadcast %cst_62 : f32 to vector<8x128xf32>
    %204 = arith.addf %203, %202 : vector<8x128xf32>
    %205 = arith.divf %203, %204 : vector<8x128xf32>
    %206 = vector.extract_strided_slice %193 {offsets = [0, 256], sizes = [8, 128], strides = [1, 1]} : vector<8x512xf32> to vector<8x128xf32>
    %207 = math.tanh %206 : vector<8x128xf32>
    %208 = vector.extract_strided_slice %193 {offsets = [0, 384], sizes = [8, 128], strides = [1, 1]} : vector<8x512xf32> to vector<8x128xf32>
    %209 = arith.negf %208 : vector<8x128xf32>
    %210 = math.exp %209 : vector<8x128xf32>
    %cst_63 = arith.constant 1.000000e+00 : f32
    %211 = vector.broadcast %cst_63 : f32 to vector<8x128xf32>
    %212 = arith.addf %211, %210 : vector<8x128xf32>
    %213 = arith.divf %211, %212 : vector<8x128xf32>
    %214 = arith.mulf %205, %183 : vector<8x128xf32>
    %215 = arith.mulf %199, %207 : vector<8x128xf32>
    %216 = arith.addf %214, %215 : vector<8x128xf32>
    %217 = math.tanh %216 : vector<8x128xf32>
    %218 = arith.mulf %213, %217 : vector<8x128xf32>
    %219 = arith.index_cast %189 : i32 to index
    %c0_64 = arith.constant 0 : index
    %220 = vector.load %arg16[%219, %c0_64] : memref<64x128xf32, #tpu.memory_space<vmem>>, vector<8x128xf32>
    tpu.vector_store %arg16[%219, %c0_64], %218 {strides = array<i32>} : memref<64x128xf32, #tpu.memory_space<vmem>>, vector<8x128xf32>,
    %c6_i32 = arith.constant 6 : i32
    %c8_i32_65 = arith.constant 8 : i32
    %221 = arith.muli %c6_i32, %c8_i32_65 : i32
    %222 = tpu.assume_multiple %221, 8 : i32
    %223 = arith.index_cast %222 : i32 to index
    %c0_66 = arith.constant 0 : index
    %224 = vector.load %arg15[%223, %c0_66] : memref<64x512xf32, #tpu.memory_space<vmem>>, vector<8x512xf32>
    %cst_67 = arith.constant dense<0.000000e+00> : vector<8x512xf32>
    %225 = tpu.matmul %218, %18, %cst_67 {dimension_numbers = #tpu.dot_dimension_numbers<[1], [0], [0], [1], [0, 0, 1, 1], [], []>} : vector<8x128xf32>, vector<128x512xf32>, vector<8x512xf32> -> vector<8x512xf32>
    %226 = arith.addf %224, %225 : vector<8x512xf32>
    %227 = vector.extract_strided_slice %226 {offsets = [0, 0], sizes = [8, 128], strides = [1, 1]} : vector<8x512xf32> to vector<8x128xf32>
    %228 = arith.negf %227 : vector<8x128xf32>
    %229 = math.exp %228 : vector<8x128xf32>
    %cst_68 = arith.constant 1.000000e+00 : f32
    %230 = vector.broadcast %cst_68 : f32 to vector<8x128xf32>
    %231 = arith.addf %230, %229 : vector<8x128xf32>
    %232 = arith.divf %230, %231 : vector<8x128xf32>
    %233 = vector.extract_strided_slice %226 {offsets = [0, 128], sizes = [8, 128], strides = [1, 1]} : vector<8x512xf32> to vector<8x128xf32>
    %234 = arith.negf %233 : vector<8x128xf32>
    %235 = math.exp %234 : vector<8x128xf32>
    %cst_69 = arith.constant 1.000000e+00 : f32
    %236 = vector.broadcast %cst_69 : f32 to vector<8x128xf32>
    %237 = arith.addf %236, %235 : vector<8x128xf32>
    %238 = arith.divf %236, %237 : vector<8x128xf32>
    %239 = vector.extract_strided_slice %226 {offsets = [0, 256], sizes = [8, 128], strides = [1, 1]} : vector<8x512xf32> to vector<8x128xf32>
    %240 = math.tanh %239 : vector<8x128xf32>
    %241 = vector.extract_strided_slice %226 {offsets = [0, 384], sizes = [8, 128], strides = [1, 1]} : vector<8x512xf32> to vector<8x128xf32>
    %242 = arith.negf %241 : vector<8x128xf32>
    %243 = math.exp %242 : vector<8x128xf32>
    %cst_70 = arith.constant 1.000000e+00 : f32
    %244 = vector.broadcast %cst_70 : f32 to vector<8x128xf32>
    %245 = arith.addf %244, %243 : vector<8x128xf32>
    %246 = arith.divf %244, %245 : vector<8x128xf32>
    %247 = arith.mulf %238, %216 : vector<8x128xf32>
    %248 = arith.mulf %232, %240 : vector<8x128xf32>
    %249 = arith.addf %247, %248 : vector<8x128xf32>
    %250 = math.tanh %249 : vector<8x128xf32>
    %251 = arith.mulf %246, %250 : vector<8x128xf32>
    %252 = arith.index_cast %222 : i32 to index
    %c0_71 = arith.constant 0 : index
    %253 = vector.load %arg16[%252, %c0_71] : memref<64x128xf32, #tpu.memory_space<vmem>>, vector<8x128xf32>
    tpu.vector_store %arg16[%252, %c0_71], %251 {strides = array<i32>} : memref<64x128xf32, #tpu.memory_space<vmem>>, vector<8x128xf32>,
    %c7_i32 = arith.constant 7 : i32
    %c8_i32_72 = arith.constant 8 : i32
    %254 = arith.muli %c7_i32, %c8_i32_72 : i32
    %255 = tpu.assume_multiple %254, 8 : i32
    %256 = arith.index_cast %255 : i32 to index
    %c0_73 = arith.constant 0 : index
    %257 = vector.load %arg15[%256, %c0_73] : memref<64x512xf32, #tpu.memory_space<vmem>>, vector<8x512xf32>
    %cst_74 = arith.constant dense<0.000000e+00> : vector<8x512xf32>
    %258 = tpu.matmul %251, %18, %cst_74 {dimension_numbers = #tpu.dot_dimension_numbers<[1], [0], [0], [1], [0, 0, 1, 1], [], []>} : vector<8x128xf32>, vector<128x512xf32>, vector<8x512xf32> -> vector<8x512xf32>
    %259 = arith.addf %257, %258 : vector<8x512xf32>
    %260 = vector.extract_strided_slice %259 {offsets = [0, 0], sizes = [8, 128], strides = [1, 1]} : vector<8x512xf32> to vector<8x128xf32>
    %261 = arith.negf %260 : vector<8x128xf32>
    %262 = math.exp %261 : vector<8x128xf32>
    %cst_75 = arith.constant 1.000000e+00 : f32
    %263 = vector.broadcast %cst_75 : f32 to vector<8x128xf32>
    %264 = arith.addf %263, %262 : vector<8x128xf32>
    %265 = arith.divf %263, %264 : vector<8x128xf32>
    %266 = vector.extract_strided_slice %259 {offsets = [0, 128], sizes = [8, 128], strides = [1, 1]} : vector<8x512xf32> to vector<8x128xf32>
    %267 = arith.negf %266 : vector<8x128xf32>
    %268 = math.exp %267 : vector<8x128xf32>
    %cst_76 = arith.constant 1.000000e+00 : f32
    %269 = vector.broadcast %cst_76 : f32 to vector<8x128xf32>
    %270 = arith.addf %269, %268 : vector<8x128xf32>
    %271 = arith.divf %269, %270 : vector<8x128xf32>
    %272 = vector.extract_strided_slice %259 {offsets = [0, 256], sizes = [8, 128], strides = [1, 1]} : vector<8x512xf32> to vector<8x128xf32>
    %273 = math.tanh %272 : vector<8x128xf32>
    %274 = vector.extract_strided_slice %259 {offsets = [0, 384], sizes = [8, 128], strides = [1, 1]} : vector<8x512xf32> to vector<8x128xf32>
    %275 = arith.negf %274 : vector<8x128xf32>
    %276 = math.exp %275 : vector<8x128xf32>
    %cst_77 = arith.constant 1.000000e+00 : f32
    %277 = vector.broadcast %cst_77 : f32 to vector<8x128xf32>
    %278 = arith.addf %277, %276 : vector<8x128xf32>
    %279 = arith.divf %277, %278 : vector<8x128xf32>
    %280 = arith.mulf %271, %249 : vector<8x128xf32>
    %281 = arith.mulf %265, %273 : vector<8x128xf32>
    %282 = arith.addf %280, %281 : vector<8x128xf32>
    %283 = math.tanh %282 : vector<8x128xf32>
    %284 = arith.mulf %279, %283 : vector<8x128xf32>
    %285 = arith.index_cast %255 : i32 to index
    %c0_78 = arith.constant 0 : index
    %286 = vector.load %arg16[%285, %c0_78] : memref<64x128xf32, #tpu.memory_space<vmem>>, vector<8x128xf32>
    tpu.vector_store %arg16[%285, %c0_78], %284 {strides = array<i32>} : memref<64x128xf32, #tpu.memory_space<vmem>>, vector<8x128xf32>,
    %c8_i32_79 = arith.constant 8 : i32
    %c0_80 = arith.constant 0 : index
    %c0_81 = arith.constant 0 : index
    %c0_82 = arith.constant 0 : index
    %287 = vector.load %arg13[%c0_80, %c0_81, %c0_82] : memref<1x8x128xf32, #tpu.memory_space<vmem>>, vector<1x8x128xf32>
    %288 = vector.shape_cast %287 : vector<1x8x128xf32> to vector<8x128xf32>
    %289 = vector.shape_cast %284 : vector<8x128xf32> to vector<1x8x128xf32>
    tpu.vector_store %arg13[%c0_80, %c0_81, %c0_82], %289 {strides = array<i32>} : memref<1x8x128xf32, #tpu.memory_space<vmem>>, vector<1x8x128xf32>,
    %c0_83 = arith.constant 0 : index
    %c0_84 = arith.constant 0 : index
    %c0_85 = arith.constant 0 : index
    %290 = vector.load %arg14[%c0_83, %c0_84, %c0_85] : memref<1x8x128xf32, #tpu.memory_space<vmem>>, vector<1x8x128xf32>
    %291 = vector.shape_cast %290 : vector<1x8x128xf32> to vector<8x128xf32>
    %292 = vector.shape_cast %282 : vector<8x128xf32> to vector<1x8x128xf32>
    tpu.vector_store %arg14[%c0_83, %c0_84, %c0_85], %292 {strides = array<i32>} : memref<1x8x128xf32, #tpu.memory_space<vmem>>, vector<1x8x128xf32>,
    %c0_86 = arith.constant 0 : index
    %c0_87 = arith.constant 0 : index
    %293 = vector.load %arg16[%c0_86, %c0_87] : memref<64x128xf32, #tpu.memory_space<vmem>>, vector<64x128xf32>
    %c0_88 = arith.constant 0 : index
    %c0_89 = arith.constant 0 : index
    %294 = vector.load %arg8[%c0_88, %c0_89] : memref<128x128xf32, #tpu.memory_space<vmem>>, vector<128x128xf32>
    %cst_90 = arith.constant dense<0.000000e+00> : vector<64x128xf32>
    %295 = tpu.matmul %293, %294, %cst_90 {dimension_numbers = #tpu.dot_dimension_numbers<[1], [0], [0], [1], [0, 0, 1, 1], [], []>} : vector<64x128xf32>, vector<128x128xf32>, vector<64x128xf32> -> vector<64x128xf32>
    %c0_91 = arith.constant 0 : index
    %c0_92 = arith.constant 0 : index
    %296 = vector.load %arg9[%c0_91, %c0_92] : memref<1x128xf32, #tpu.memory_space<vmem>>, vector<1x128xf32>
    %297 = vector.broadcast %296 : vector<1x128xf32> to vector<64x128xf32>
    %298 = arith.addf %295, %297 : vector<64x128xf32>
    %c0_93 = arith.constant 0 : index
    %c0_94 = arith.constant 0 : index
    %c0_95 = arith.constant 0 : index
    %299 = vector.load %arg12[%c0_93, %c0_94, %c0_95] : memref<1x64x128xf32, #tpu.memory_space<vmem>>, vector<1x64x128xf32>
    %300 = vector.shape_cast %299 : vector<1x64x128xf32> to vector<64x128xf32>
    %301 = vector.shape_cast %298 : vector<64x128xf32> to vector<1x64x128xf32>
    tpu.vector_store %arg12[%c0_93, %c0_94, %c0_95], %301 {strides = array<i32>} : memref<1x64x128xf32, #tpu.memory_space<vmem>>, vector<1x64x128xf32>,
    return
  }
  func.func @transform_0(%arg0: i32, %arg1: i32) -> (i32, i32, i32) {
    %c0_i32 = arith.constant 0 : i32
    %c0_i32_0 = arith.constant 0 : i32
    return %arg0, %arg1, %c0_i32 : i32, i32, i32
  }
  func.func @transform_1(%arg0: i32, %arg1: i32) -> (i32, i32) {
    %c0_i32 = arith.constant 0 : i32
    %c0_i32_0 = arith.constant 0 : i32
    %c0_i32_1 = arith.constant 0 : i32
    return %c0_i32, %c0_i32_0 : i32, i32
  }
  func.func @transform_2(%arg0: i32, %arg1: i32) -> (i32, i32) {
    %c0_i32 = arith.constant 0 : i32
    %c0_i32_0 = arith.constant 0 : i32
    %c0_i32_1 = arith.constant 0 : i32
    return %c0_i32, %c0_i32_0 : i32, i32
  }
  func.func @transform_3(%arg0: i32, %arg1: i32) -> (i32, i32) {
    %c0_i32 = arith.constant 0 : i32
    %c0_i32_0 = arith.constant 0 : i32
    %c0_i32_1 = arith.constant 0 : i32
    return %c0_i32, %c0_i32_0 : i32, i32
  }
  func.func @transform_4(%arg0: i32, %arg1: i32) -> (i32, i32) {
    %c0_i32 = arith.constant 0 : i32
    %c0_i32_0 = arith.constant 0 : i32
    %c0_i32_1 = arith.constant 0 : i32
    return %c0_i32, %c0_i32_0 : i32, i32
  }
  func.func @transform_5(%arg0: i32, %arg1: i32) -> (i32, i32) {
    %c0_i32 = arith.constant 0 : i32
    %c0_i32_0 = arith.constant 0 : i32
    %c0_i32_1 = arith.constant 0 : i32
    return %c0_i32, %c0_i32_0 : i32, i32
  }
  func.func @transform_6(%arg0: i32, %arg1: i32) -> (i32, i32) {
    %c0_i32 = arith.constant 0 : i32
    %c0_i32_0 = arith.constant 0 : i32
    %c0_i32_1 = arith.constant 0 : i32
    return %c0_i32, %c0_i32_0 : i32, i32
  }
  func.func @transform_7(%arg0: i32, %arg1: i32) -> (i32, i32) {
    %c0_i32 = arith.constant 0 : i32
    %c0_i32_0 = arith.constant 0 : i32
    %c0_i32_1 = arith.constant 0 : i32
    return %c0_i32, %c0_i32_0 : i32, i32
  }
  func.func @transform_8(%arg0: i32, %arg1: i32) -> (i32, i32, i32) {
    %c0_i32 = arith.constant 0 : i32
    %c0_i32_0 = arith.constant 0 : i32
    %c0_i32_1 = arith.constant 0 : i32
    return %arg0, %c0_i32, %c0_i32_0 : i32, i32, i32
  }
  func.func @transform_9(%arg0: i32, %arg1: i32) -> (i32, i32, i32) {
    %c0_i32 = arith.constant 0 : i32
    %c0_i32_0 = arith.constant 0 : i32
    %c0_i32_1 = arith.constant 0 : i32
    return %arg0, %c0_i32, %c0_i32_0 : i32, i32, i32
  }
  func.func @transform_10(%arg0: i32, %arg1: i32) -> (i32, i32, i32) {
    %c0_i32 = arith.constant 0 : i32
    %c0_i32_0 = arith.constant 0 : i32
    return %arg0, %arg1, %c0_i32 : i32, i32, i32
  }
  func.func @transform_11(%arg0: i32, %arg1: i32) -> (i32, i32, i32) {
    %c0_i32 = arith.constant 0 : i32
    %c0_i32_0 = arith.constant 0 : i32
    %c0_i32_1 = arith.constant 0 : i32
    return %arg0, %c0_i32, %c0_i32_0 : i32, i32, i32
  }
  func.func @transform_12(%arg0: i32, %arg1: i32) -> (i32, i32, i32) {
    %c0_i32 = arith.constant 0 : i32
    %c0_i32_0 = arith.constant 0 : i32
    %c0_i32_1 = arith.constant 0 : i32
    return %arg0, %c0_i32, %c0_i32_0 : i32, i32, i32
  }
}

</mosaic_0001>

<llo_original>
// kernel: rdqn_forward.1
$region0: #{rdqn_forward.1}
  #allocation0 [shape = 'u32[]', space=smem, size = 0x4, offset = 0x4, fixed_abs, tag = 'smem constant byte address 0x4 - core index']
  #allocation1 [shape = 'u32[144,128]{1,0:T(1,128)}', space=vmem, size = 0x12000, scoped, tag = 'internal scratch']
  #allocation2 [shape = 'f32[64,512]{1,0:T(8,128)}', space=vmem, size = 0x20000, scoped, tag = 'scratch operand']
  #allocation3 [shape = 'f32[64,128]{1,0:T(8,128)}', space=vmem, size = 0x8000, scoped, tag = 'scratch operand']
  %s0 = inlined_call_operand.vmem [shape: f32[1,64,16], index: 0, kind: input, shape index: {}]
  %s1 = inlined_call_operand.vmem [shape: f32[16,128], index: 1, kind: input, shape index: {}]
  %s2 = inlined_call_operand.vmem [shape: f32[1,128], index: 2, kind: input, shape index: {}]
  %s3 = inlined_call_operand.vmem [shape: f32[128,512], index: 3, kind: input, shape index: {}]
  %s4 = inlined_call_operand.hbm [shape: f32[128,512], index: 4, kind: input, shape index: {}]
  %s5 = inlined_call_operand.vmem [shape: f32[1,512], index: 5, kind: input, shape index: {}]
  %s6 = inlined_call_operand.vmem [shape: f32[128,128], index: 6, kind: input, shape index: {}]
  %s7 = inlined_call_operand.vmem [shape: f32[1,128], index: 7, kind: input, shape index: {}]
  %s8 = inlined_call_operand.vmem [shape: f32[1,8,128], index: 8, kind: input, shape index: {}]
  %s9 = inlined_call_operand.vmem [shape: f32[1,8,128], index: 9, kind: input, shape index: {}]
  %s10 = inlined_call_operand.vmem [shape: f32[1,64,128], index: 10, kind: output, shape index: {0}]
  %s11 = inlined_call_operand.vmem [shape: f32[1,8,128], index: 11, kind: output, shape index: {1}]
  %s12 = inlined_call_operand.vmem [shape: f32[1,8,128], index: 12, kind: output, shape index: {2}]
  %13 = xla_tuple %s10, %s11, %s12
  %s14 = sld [smem:[#allocation0]]
  $region74: #{rdqn_forward.1} parent=0
    _
  %s16 = ssub.s32 1, %s14
  %s17 = scalar_select 0, %s16, %s14
  $region1: #{rdqn_forward.1} parent=0
    #allocation4 [shape = 'u8[262144]{0}', space=vmem, size = 0x40000, scoped, tag = 'input window, operand 4, single buffered']
    #allocation5 [shape = 's32[1]{0}', space=sflag, size = 0x4, scoped, tag = 'scoped memory for rdqn_forward.1']
    %18 = vsyncpa [#allocation5], 0
    // Predicated region
    $region2: #{rdqn_forward.1} parent=1 // pred_check
      _
    $region3: #{rdqn_forward.1} parent=1 // pred_check_branch
      %20 = sbr.rel (0) target = $region5
    $region4: #{rdqn_forward.1} parent=1 // pred_region
      _
    $region5: #{rdqn_forward.1} parent=1 // pred_fallthru
      _
    // Predicated region
    $region6: #{rdqn_forward.1} parent=1 // pred_check
      _
    $region7: #{rdqn_forward.1} parent=1 // pred_check_branch
      %22 = sbr.rel (0) target = $region9
    $region8: #{rdqn_forward.1} parent=1 // pred_region
      _
    $region9: #{rdqn_forward.1} parent=1 // pred_fallthru
      _
    // Predicated region
    $region10: #{rdqn_forward.1} parent=1 // pred_check
      _
    $region11: #{rdqn_forward.1} parent=1 // pred_check_branch
      %24 = sbr.rel (0) target = $region13
    $region12: #{rdqn_forward.1} parent=1 // pred_region
      _
    $region13: #{rdqn_forward.1} parent=1 // pred_fallthru
      _
    // Predicated region
    $region14: #{rdqn_forward.1} parent=1 // pred_check
      _
    $region15: #{rdqn_forward.1} parent=1 // pred_check_branch
      %26 = sbr.rel (0) target = $region17
    $region16: #{rdqn_forward.1} parent=1 // pred_region
      _
    $region17: #{rdqn_forward.1} parent=1 // pred_fallthru
      _
    // Predicated region
    $region18: #{rdqn_forward.1} parent=1 // pred_check
      _
    $region19: #{rdqn_forward.1} parent=1 // pred_check_branch
      %28 = sbr.rel (0) target = $region21
    $region20: #{rdqn_forward.1} parent=1 // pred_region
      %s30 = ssub.s32 8192, 8192
      %31 = vsyncadd [#allocation5], %s30
      %s32 = sshll.u32 [#allocation4], 4
      %s33 = int_to_ptr.vmem [resolvable:$true] %s32
      %38 = dma.hbm_to_vmem [thread:$0]  %s4, 8192, %s33, [#allocation5], 512, 512, 32
    $region21: #{rdqn_forward.1} parent=1 // pred_fallthru
      _
    // Predicated region
    $region22: #{rdqn_forward.1} parent=1 // pred_check
      _
    $region23: #{rdqn_forward.1} parent=1 // pred_check_branch
      %40 = sbr.rel (0) target = $region25
    $region24: #{rdqn_forward.1} parent=1 // pred_region
      _
    $region25: #{rdqn_forward.1} parent=1 // pred_fallthru
      _
    // Predicated region
    $region26: #{rdqn_forward.1} parent=1 // pred_check
      _
    $region27: #{rdqn_forward.1} parent=1 // pred_check_branch
      %42 = sbr.rel (0) target = $region29
    $region28: #{rdqn_forward.1} parent=1 // pred_region
      _
    $region29: #{rdqn_forward.1} parent=1 // pred_fallthru
      _
    // Predicated region
    $region30: #{rdqn_forward.1} parent=1 // pred_check
      _
    $region31: #{rdqn_forward.1} parent=1 // pred_check_branch
      %44 = sbr.rel (0) target = $region33
    $region32: #{rdqn_forward.1} parent=1 // pred_region
      _
    $region33: #{rdqn_forward.1} parent=1 // pred_fallthru
      _
    // Predicated region
    $region34: #{rdqn_forward.1} parent=1 // pred_check
      _
    $region35: #{rdqn_forward.1} parent=1 // pred_check_branch
      %46 = sbr.rel (0) target = $region37
    $region36: #{rdqn_forward.1} parent=1 // pred_region
      _
    $region37: #{rdqn_forward.1} parent=1 // pred_fallthru
      _
    // Predicated region
    $region38: #{rdqn_forward.1} parent=1 // pred_check
      _
    $region39: #{rdqn_forward.1} parent=1 // pred_check_branch
      %48 = sbr.rel (0) target = $region41
    $region40: #{rdqn_forward.1} parent=1 // pred_region
      _
    $region41: #{rdqn_forward.1} parent=1 // pred_fallthru
      _
    // Predicated region
    $region42: #{rdqn_forward.1} parent=1 // pred_check
      _
    $region43: #{rdqn_forward.1} parent=1 // pred_check_branch
      %50 = sbr.rel (0) target = $region45
    $region44: #{rdqn_forward.1} parent=1 // pred_region
      %51 = dma.done [#allocation5], 8192
    $region45: #{rdqn_forward.1} parent=1 // pred_fallthru
      _
    %p52 = scmp.eq.s32.totalorder 0, 0
    // Predicated region
    $region46: #{rdqn_forward.1} parent=1 // pred_check
      %p53 = pneg %p52
    $region47: #{rdqn_forward.1} parent=1 // pred_check_branch
      %55 = sbr.rel (%p53) target = $region49
    $region48: #{rdqn_forward.1} parent=1 // pred_region
      %v56 = vld [vmem:[%s8] sm:$0xff]
      %57 = vst [vmem:[%s11] sm:$0xff] %v56
      %v58 = vld [vmem:[%s9] sm:$0xff]
      %59 = vst [vmem:[%s12] sm:$0xff] %v58
    $region49: #{rdqn_forward.1} parent=1 // pred_fallthru
      _
    %v60 = vld [vmem:[%s0] sm:$0xff]
    %v61 = vld [vmem:[%s0 + $0x8] sm:$0xff]
    %v62 = vld [vmem:[%s0 + $0x10] sm:$0xff]
    %v63 = vld [vmem:[%s0 + $0x18] sm:$0xff]
    %v64 = vld [vmem:[%s0 + $0x20] sm:$0xff]
    %v65 = vld [vmem:[%s0 + $0x28] sm:$0xff]
    %v66 = vld [vmem:[%s0 + $0x30] sm:$0xff]
    %v67 = vld [vmem:[%s0 + $0x38] sm:$0xff]
    %v68 = vld [vmem:[%s1] sm:$0xff]
    %v69 = vld [vmem:[%s1 + $0x8] sm:$0xff]
    %v70 = vld [vmem:[%s2] sm:$0x1]
    %v72 = vlaneseq
    %v73 = vshrl.u32 %v72, 7
    %v74 = vsub.s32 0, %v73
    %v75 = vrot.slane %v70, %v74
    %vm77 = vcmask 130048
    %v79 = vsel %vm77, %v60, 0
    %v82 = vsel %vm77, %v61, 0
    %v85 = vsel %vm77, %v62, 0
    %v88 = vsel %vm77, %v63, 0
    %v91 = vsel %vm77, %v64, 0
    %v94 = vsel %vm77, %v65, 0
    %v97 = vsel %vm77, %v66, 0
    %v100 = vsel %vm77, %v67, 0
    %102 = vmatprep.subr.mxu0 0.0
    %103 = vmatpush1.msra.mxu0 0.0
    %104 = vmatprep.subr.mxu0 0.0
    %105 = vmatpush1.msra.mxu0 0.0
    %106 = vmatprep.subr.mxu0 0.0
    %107 = vmatpush1.msra.mxu0 0.0
    %108 = vmatprep.subr.mxu0 0.0
    %109 = vmatpush1.msra.mxu0 0.0
    %110 = vmatprep.subr.mxu0 0.0
    %111 = vmatpush1.msra.mxu0 0.0
    %112 = vmatprep.subr.mxu0 0.0
    %113 = vmatpush1.msra.mxu0 0.0
    %114 = vmatprep.subr.mxu0 0.0
    %115 = vmatpush1.msra.mxu0 0.0
    %116 = vmatprep.subr.mxu0 0.0
    %117 = vmatpush1.msra.mxu0 0.0
    %118 = vmatprep.subr.mxu0 0.0
    %119 = vmatpush1.msra.mxu0 0.0
    %120 = vmatprep.subr.mxu0 0.0
    %121 = vmatpush1.msra.mxu0 0.0
    %122 = vmatprep.subr.mxu0 0.0
    %123 = vmatpush1.msra.mxu0 0.0
    %124 = vmatprep.subr.mxu0 0.0
    %125 = vmatpush1.msra.mxu0 0.0
    %126 = vmatprep.subr.mxu0 0.0
    %127 = vmatpush1.msra.mxu0 0.0
    %128 = vmatprep.subr.mxu0 0.0
    %129 = vmatpush1.msra.mxu0 0.0
    %130 = vmatprep.subr.mxu0 0.0
    %131 = vmatpush1.msra.mxu0 %v69
    %132 = vmatprep.subr.mxu0 0.0
    %133 = vmatpush1.msra.mxu0 %v68
    %134 = vmatprep.subr.mxu0 0.0
    %135 = vmatpush2.msra.mxu0 0.0
    %136 = vmatprep.subr.mxu0 0.0
    %137 = vmatpush2.msra.mxu0 0.0
    %138 = vmatprep.subr.mxu0 0.0
    %139 = vmatpush2.msra.mxu0 0.0
    %140 = vmatprep.subr.mxu0 0.0
    %141 = vmatpush2.msra.mxu0 0.0
    %142 = vmatprep.subr.mxu0 0.0
    %143 = vmatpush2.msra.mxu0 0.0
    %144 = vmatprep.subr.mxu0 0.0
    %145 = vmatpush2.msra.mxu0 0.0
    %146 = vmatprep.subr.mxu0 0.0
    %147 = vmatpush2.msra.mxu0 0.0
    %148 = vmatprep.subr.mxu0 0.0
    %149 = vmatpush2.msra.mxu0 0.0
    %150 = vmatprep.subr.mxu0 0.0
    %151 = vmatpush2.msra.mxu0 0.0
    %152 = vmatprep.subr.mxu0 0.0
    %153 = vmatpush2.msra.mxu0 0.0
    %154 = vmatprep.subr.mxu0 0.0
    %155 = vmatpush2.msra.mxu0 0.0
    %156 = vmatprep.subr.mxu0 0.0
    %157 = vmatpush2.msra.mxu0 0.0
    %158 = vmatprep.subr.mxu0 0.0
    %159 = vmatpush2.msra.mxu0 0.0
    %160 = vmatprep.subr.mxu0 0.0
    %161 = vmatpush2.msra.mxu0 0.0
    %162 = vmatprep.subr.mxu0 0.0
    %163 = vmatpush2.msra.mxu0 0.0
    %164 = vmatprep.subr.mxu0 0.0
    %165 = vmatpush2.msra.mxu0 0.0
    %166 = vmatprep.mubr.f32.mxu0 0.0
    %167 = vmatmul.mubr.f32.gmra.mxu0 %v79
    %v168 = vpop.f32.mrf.mxu0
    %v169 = vadd.f32 %v75, %v168
    %v170 = vpop.f32.mrf.mxu0
    %171 = vmatprep.mubr.f32.mxu0 0.0
    %172 = vmatmul.mubr.f32.gmra.mxu0 %v82
    %v173 = vpop.f32.mrf.mxu0
    %v174 = vadd.f32 %v75, %v173
    %v175 = vpop.f32.mrf.mxu0
    %176 = vmatprep.mubr.f32.mxu0 0.0
    %177 = vmatmul.mubr.f32.gmra.mxu0 %v85
    %v178 = vpop.f32.mrf.mxu0
    %v179 = vadd.f32 %v75, %v178
    %v180 = vpop.f32.mrf.mxu0
    %181 = vmatprep.mubr.f32.mxu0 0.0
    %182 = vmatmul.mubr.f32.gmra.mxu0 %v88
    %v183 = vpop.f32.mrf.mxu0
    %v184 = vadd.f32 %v75, %v183
    %v185 = vpop.f32.mrf.mxu0
    %186 = vmatprep.mubr.f32.mxu0 0.0
    %187 = vmatmul.mubr.f32.gmra.mxu0 %v91
    %v188 = vpop.f32.mrf.mxu0
    %v189 = vadd.f32 %v75, %v188
    %v190 = vpop.f32.mrf.mxu0
    %191 = vmatprep.mubr.f32.mxu0 0.0
    %192 = vmatmul.mubr.f32.gmra.mxu0 %v94
    %v193 = vpop.f32.mrf.mxu0
    %v194 = vadd.f32 %v75, %v193
    %v195 = vpop.f32.mrf.mxu0
    %196 = vmatprep.mubr.f32.mxu0 0.0
    %197 = vmatmul.mubr.f32.gmra.mxu0 %v97
    %v198 = vpop.f32.mrf.mxu0
    %v199 = vadd.f32 %v75, %v198
    %v200 = vpop.f32.mrf.mxu0
    %201 = vmatprep.mubr.f32.mxu0 0.0
    %202 = vmatmul.mubr.f32.gmra.mxu0 %v100
    %v203 = vpop.f32.mrf.mxu0
    %v204 = vadd.f32 %v75, %v203
    %v205 = vpop.f32.mrf.mxu0
    %206 = vdwg.mxu0
    %v207 = vmax.f32 %v169, 0.0
    %v208 = vmax.f32 %v174, 0.0
    %v209 = vmax.f32 %v179, 0.0
    %v210 = vmax.f32 %v184, 0.0
    %v211 = vmax.f32 %v189, 0.0
    %v212 = vmax.f32 %v194, 0.0
    %v213 = vmax.f32 %v199, 0.0
    %v214 = vmax.f32 %v204, 0.0
    %v215 = vld [vmem:[%s3] sm:$0xff]
    %v216 = vld [vmem:[%s3 + $0x8] sm:$0xff]
    %v217 = vld [vmem:[%s3 + $0x10] sm:$0xff]
    %v218 = vld [vmem:[%s3 + $0x18] sm:$0xff]
    %v219 = vld [vmem:[%s3 + $0x20] sm:$0xff]
    %v220 = vld [vmem:[%s3 + $0x28] sm:$0xff]
    %v221 = vld [vmem:[%s3 + $0x30] sm:$0xff]
    %v222 = vld [vmem:[%s3 + $0x38] sm:$0xff]
    %v223 = vld [vmem:[%s3 + $0x40] sm:$0xff]
    %v224 = vld [vmem:[%s3 + $0x48] sm:$0xff]
    %v225 = vld [vmem:[%s3 + $0x50] sm:$0xff]
    %v226 = vld [vmem:[%s3 + $0x58] sm:$0xff]
    %v227 = vld [vmem:[%s3 + $0x60] sm:$0xff]
    %v228 = vld [vmem:[%s3 + $0x68] sm:$0xff]
    %v229 = vld [vmem:[%s3 + $0x70] sm:$0xff]
    %v230 = vld [vmem:[%s3 + $0x78] sm:$0xff]
    %v231 = vld [vmem:[%s3 + $0x80] sm:$0xff]
    %v232 = vld [vmem:[%s3 + $0x88] sm:$0xff]
    %v233 = vld [vmem:[%s3 + $0x90] sm:$0xff]
    %v234 = vld [vmem:[%s3 + $0x98] sm:$0xff]
    %v235 = vld [vmem:[%s3 + $0xa0] sm:$0xff]
    %v236 = vld [vmem:[%s3 + $0xa8] sm:$0xff]
    %v237 = vld [vmem:[%s3 + $0xb0] sm:$0xff]
    %v238 = vld [vmem:[%s3 + $0xb8] sm:$0xff]
    %v239 = vld [vmem:[%s3 + $0xc0] sm:$0xff]
    %v240 = vld [vmem:[%s3 + $0xc8] sm:$0xff]
    %v241 = vld [vmem:[%s3 + $0xd0] sm:$0xff]
    %v242 = vld [vmem:[%s3 + $0xd8] sm:$0xff]
    %v243 = vld [vmem:[%s3 + $0xe0] sm:$0xff]
    %v244 = vld [vmem:[%s3 + $0xe8] sm:$0xff]
    %v245 = vld [vmem:[%s3 + $0xf0] sm:$0xff]
    %v246 = vld [vmem:[%s3 + $0xf8] sm:$0xff]
    %v247 = vld [vmem:[%s3 + $0x100] sm:$0xff]
    %v248 = vld [vmem:[%s3 + $0x108] sm:$0xff]
    %v249 = vld [vmem:[%s3 + $0x110] sm:$0xff]
    %v250 = vld [vmem:[%s3 + $0x118] sm:$0xff]
    %v251 = vld [vmem:[%s3 + $0x120] sm:$0xff]
    %v252 = vld [vmem:[%s3 + $0x128] sm:$0xff]
    %v253 = vld [vmem:[%s3 + $0x130] sm:$0xff]
    %v254 = vld [vmem:[%s3 + $0x138] sm:$0xff]
    %v255 = vld [vmem:[%s3 + $0x140] sm:$0xff]
    %v256 = vld [vmem:[%s3 + $0x148] sm:$0xff]
    %v257 = vld [vmem:[%s3 + $0x150] sm:$0xff]
    %v258 = vld [vmem:[%s3 + $0x158] sm:$0xff]
    %v259 = vld [vmem:[%s3 + $0x160] sm:$0xff]
    %v260 = vld [vmem:[%s3 + $0x168] sm:$0xff]
    %v261 = vld [vmem:[%s3 + $0x170] sm:$0xff]
    %v262 = vld [vmem:[%s3 + $0x178] sm:$0xff]
    %v263 = vld [vmem:[%s3 + $0x180] sm:$0xff]
    %v264 = vld [vmem:[%s3 + $0x188] sm:$0xff]
    %v265 = vld [vmem:[%s3 + $0x190] sm:$0xff]
    %v266 = vld [vmem:[%s3 + $0x198] sm:$0xff]
    %v267 = vld [vmem:[%s3 + $0x1a0] sm:$0xff]
    %v268 = vld [vmem:[%s3 + $0x1a8] sm:$0xff]
    %v269 = vld [vmem:[%s3 + $0x1b0] sm:$0xff]
    %v270 = vld [vmem:[%s3 + $0x1b8] sm:$0xff]
    %v271 = vld [vmem:[%s3 + $0x1c0] sm:$0xff]
    %v272 = vld [vmem:[%s3 + $0x1c8] sm:$0xff]
    %v273 = vld [vmem:[%s3 + $0x1d0] sm:$0xff]
    %v274 = vld [vmem:[%s3 + $0x1d8] sm:$0xff]
    %v275 = vld [vmem:[%s3 + $0x1e0] sm:$0xff]
    %v276 = vld [vmem:[%s3 + $0x1e8] sm:$0xff]
    %v277 = vld [vmem:[%s3 + $0x1f0] sm:$0xff]
    %v278 = vld [vmem:[%s3 + $0x1f8] sm:$0xff]
    %v279 = vld [vmem:[%s5] sm:$0xf]
    %v281 = vlaneseq
    %v282 = vshrl.u32 %v281, 7
    %v283 = vsub.s32 0, %v282
    %v284 = vrot.slane %v279, %v283
    %v285 = vlaneseq
    %v286 = vshrl.u32 %v285, 7
    %v287 = vsub.s32 1, %v286
    %v288 = vrot.slane %v279, %v287
    %v289 = vlaneseq
    %v290 = vshrl.u32 %v289, 7
    %v291 = vsub.s32 2, %v290
    %v292 = vrot.slane %v279, %v291
    %v293 = vlaneseq
    %v294 = vshrl.u32 %v293, 7
    %v295 = vsub.s32 3, %v294
    %v296 = vrot.slane %v279, %v295
    %301 = vmatprep.subr.mxu0 %v276
    %302 = vmatpush1.msra.mxu0 %v275
    %303 = vmatprep.subr.mxu0 %v272
    %304 = vmatpush1.msra.mxu0 %v271
    %305 = vmatprep.subr.mxu0 %v268
    %306 = vmatpush1.msra.mxu0 %v267
    %307 = vmatprep.subr.mxu0 %v264
    %308 = vmatpush1.msra.mxu0 %v263
    %309 = vmatprep.subr.mxu0 %v260
    %310 = vmatpush1.msra.mxu0 %v259
    %311 = vmatprep.subr.mxu0 %v256
    %312 = vmatpush1.msra.mxu0 %v255
    %313 = vmatprep.subr.mxu0 %v252
    %314 = vmatpush1.msra.mxu0 %v251
    %315 = vmatprep.subr.mxu0 %v248
    %316 = vmatpush1.msra.mxu0 %v247
    %317 = vmatprep.subr.mxu0 %v244
    %318 = vmatpush1.msra.mxu0 %v243
    %319 = vmatprep.subr.mxu0 %v240
    %320 = vmatpush1.msra.mxu0 %v239
    %321 = vmatprep.subr.mxu0 %v236
    %322 = vmatpush1.msra.mxu0 %v235
    %323 = vmatprep.subr.mxu0 %v232
    %324 = vmatpush1.msra.mxu0 %v231
    %325 = vmatprep.subr.mxu0 %v228
    %326 = vmatpush1.msra.mxu0 %v227
    %327 = vmatprep.subr.mxu0 %v224
    %328 = vmatpush1.msra.mxu0 %v223
    %329 = vmatprep.subr.mxu0 %v220
    %330 = vmatpush1.msra.mxu0 %v219
    %331 = vmatprep.subr.mxu0 %v216
    %332 = vmatpush1.msra.mxu0 %v215
    %333 = vmatprep.subr.mxu0 0.0
    %334 = vmatpush2.msra.mxu0 0.0
    %335 = vmatprep.subr.mxu0 0.0
    %336 = vmatpush2.msra.mxu0 0.0
    %337 = vmatprep.subr.mxu0 0.0
    %338 = vmatpush2.msra.mxu0 0.0
    %339 = vmatprep.subr.mxu0 0.0
    %340 = vmatpush2.msra.mxu0 0.0
    %341 = vmatprep.subr.mxu0 0.0
    %342 = vmatpush2.msra.mxu0 0.0
    %343 = vmatprep.subr.mxu0 0.0
    %344 = vmatpush2.msra.mxu0 0.0
    %345 = vmatprep.subr.mxu0 0.0
    %346 = vmatpush2.msra.mxu0 0.0
    %347 = vmatprep.subr.mxu0 0.0
    %348 = vmatpush2.msra.mxu0 0.0
    %349 = vmatprep.subr.mxu0 0.0
    %350 = vmatpush2.msra.mxu0 0.0
    %351 = vmatprep.subr.mxu0 0.0
    %352 = vmatpush2.msra.mxu0 0.0
    %353 = vmatprep.subr.mxu0 0.0
    %354 = vmatpush2.msra.mxu0 0.0
    %355 = vmatprep.subr.mxu0 0.0
    %356 = vmatpush2.msra.mxu0 0.0
    %357 = vmatprep.subr.mxu0 0.0
    %358 = vmatpush2.msra.mxu0 0.0
    %359 = vmatprep.subr.mxu0 0.0
    %360 = vmatpush2.msra.mxu0 0.0
    %361 = vmatprep.subr.mxu0 0.0
    %362 = vmatpush2.msra.mxu0 0.0
    %363 = vmatprep.subr.mxu0 0.0
    %364 = vmatpush2.msra.mxu0 0.0
    %365 = vmatprep.mubr.f32.mxu0 0.0
    %366 = vmatmul.mubr.f32.gmra.mxu0 %v207
    %v367 = vpop.f32.mrf.mxu0
    %v368 = vadd.f32 %v284, %v367
    %v369 = vpop.f32.mrf.mxu0
    %v370 = vadd.f32 %v288, %v369
    %371 = vmatprep.mubr.f32.mxu0 0.0
    %372 = vmatmul.mubr.f32.gmra.mxu0 %v208
    %v373 = vpop.f32.mrf.mxu0
    %v374 = vadd.f32 %v284, %v373
    %v375 = vpop.f32.mrf.mxu0
    %v376 = vadd.f32 %v288, %v375
    %377 = vmatprep.mubr.f32.mxu0 0.0
    %378 = vmatmul.mubr.f32.gmra.mxu0 %v209
    %v379 = vpop.f32.mrf.mxu0
    %v380 = vadd.f32 %v284, %v379
    %v381 = vpop.f32.mrf.mxu0
    %v382 = vadd.f32 %v288, %v381
    %383 = vmatprep.mubr.f32.mxu0 0.0
    %384 = vmatmul.mubr.f32.gmra.mxu0 %v210
    %v385 = vpop.f32.mrf.mxu0
    %v386 = vadd.f32 %v284, %v385
    %v387 = vpop.f32.mrf.mxu0
    %v388 = vadd.f32 %v288, %v387
    %389 = vmatprep.mubr.f32.mxu0 0.0
    %390 = vmatmul.mubr.f32.gmra.mxu0 %v211
    %v391 = vpop.f32.mrf.mxu0
    %v392 = vadd.f32 %v284, %v391
    %v393 = vpop.f32.mrf.mxu0
    %v394 = vadd.f32 %v288, %v393
    %395 = vmatprep.mubr.f32.mxu0 0.0
    %396 = vmatmul.mubr.f32.gmra.mxu0 %v212
    %v397 = vpop.f32.mrf.mxu0
    %v398 = vadd.f32 %v284, %v397
    %v399 = vpop.f32.mrf.mxu0
    %v400 = vadd.f32 %v288, %v399
    %401 = vmatprep.mubr.f32.mxu0 0.0
    %402 = vmatmul.mubr.f32.gmra.mxu0 %v213
    %v403 = vpop.f32.mrf.mxu0
    %v404 = vadd.f32 %v284, %v403
    %v405 = vpop.f32.mrf.mxu0
    %v406 = vadd.f32 %v288, %v405
    %407 = vmatprep.mubr.f32.mxu0 0.0
    %408 = vmatmul.mubr.f32.gmra.mxu0 %v214
    %v409 = vpop.f32.mrf.mxu0
    %v410 = vadd.f32 %v284, %v409
    %v411 = vpop.f32.mrf.mxu0
    %v412 = vadd.f32 %v288, %v411
    %413 = vdwg.mxu0
    %414 = vmatprep.subr.mxu0 %v278
    %415 = vmatpush1.msra.mxu0 %v277
    %416 = vmatprep.subr.mxu0 %v274
    %417 = vmatpush1.msra.mxu0 %v273
    %418 = vmatprep.subr.mxu0 %v270
    %419 = vmatpush1.msra.mxu0 %v269
    %420 = vmatprep.subr.mxu0 %v266
    %421 = vmatpush1.msra.mxu0 %v265
    %422 = vmatprep.subr.mxu0 %v262
    %423 = vmatpush1.msra.mxu0 %v261
    %424 = vmatprep.subr.mxu0 %v258
    %425 = vmatpush1.msra.mxu0 %v257
    %426 = vmatprep.subr.mxu0 %v254
    %427 = vmatpush1.msra.mxu0 %v253
    %428 = vmatprep.subr.mxu0 %v250
    %429 = vmatpush1.msra.mxu0 %v249
    %430 = vmatprep.subr.mxu0 %v246
    %431 = vmatpush1.msra.mxu0 %v245
    %432 = vmatprep.subr.mxu0 %v242
    %433 = vmatpush1.msra.mxu0 %v241
    %434 = vmatprep.subr.mxu0 %v238
    %435 = vmatpush1.msra.mxu0 %v237
    %436 = vmatprep.subr.mxu0 %v234
    %437 = vmatpush1.msra.mxu0 %v233
    %438 = vmatprep.subr.mxu0 %v230
    %439 = vmatpush1.msra.mxu0 %v229
    %440 = vmatprep.subr.mxu0 %v226
    %441 = vmatpush1.msra.mxu0 %v225
    %442 = vmatprep.subr.mxu0 %v222
    %443 = vmatpush1.msra.mxu0 %v221
    %444 = vmatprep.subr.mxu0 %v218
    %445 = vmatpush1.msra.mxu0 %v217
    %446 = vmatprep.subr.mxu0 0.0
    %447 = vmatpush2.msra.mxu0 0.0
    %448 = vmatprep.subr.mxu0 0.0
    %449 = vmatpush2.msra.mxu0 0.0
    %450 = vmatprep.subr.mxu0 0.0
    %451 = vmatpush2.msra.mxu0 0.0
    %452 = vmatprep.subr.mxu0 0.0
    %453 = vmatpush2.msra.mxu0 0.0
    %454 = vmatprep.subr.mxu0 0.0
    %455 = vmatpush2.msra.mxu0 0.0
    %456 = vmatprep.subr.mxu0 0.0
    %457 = vmatpush2.msra.mxu0 0.0
    %458 = vmatprep.subr.mxu0 0.0
    %459 = vmatpush2.msra.mxu0 0.0
    %460 = vmatprep.subr.mxu0 0.0
    %461 = vmatpush2.msra.mxu0 0.0
    %462 = vmatprep.subr.mxu0 0.0
    %463 = vmatpush2.msra.mxu0 0.0
    %464 = vmatprep.subr.mxu0 0.0
    %465 = vmatpush2.msra.mxu0 0.0
    %466 = vmatprep.subr.mxu0 0.0
    %467 = vmatpush2.msra.mxu0 0.0
    %468 = vmatprep.subr.mxu0 0.0
    %469 = vmatpush2.msra.mxu0 0.0
    %470 = vmatprep.subr.mxu0 0.0
    %471 = vmatpush2.msra.mxu0 0.0
    %472 = vmatprep.subr.mxu0 0.0
    %473 = vmatpush2.msra.mxu0 0.0
    %474 = vmatprep.subr.mxu0 0.0
    %475 = vmatpush2.msra.mxu0 0.0
    %476 = vmatprep.subr.mxu0 0.0
    %477 = vmatpush2.msra.mxu0 0.0
    %478 = vmatprep.mubr.f32.mxu0 0.0
    %479 = vmatmul.mubr.f32.gmra.mxu0 %v207
    %v480 = vpop.f32.mrf.mxu0
    %v481 = vadd.f32 %v292, %v480
    %v482 = vpop.f32.mrf.mxu0
    %v483 = vadd.f32 %v296, %v482
    %484 = vmatprep.mubr.f32.mxu0 0.0
    %485 = vmatmul.mubr.f32.gmra.mxu0 %v208
    %v486 = vpop.f32.mrf.mxu0
    %v487 = vadd.f32 %v292, %v486
    %v488 = vpop.f32.mrf.mxu0
    %v489 = vadd.f32 %v296, %v488
    %490 = vmatprep.mubr.f32.mxu0 0.0
    %491 = vmatmul.mubr.f32.gmra.mxu0 %v209
    %v492 = vpop.f32.mrf.mxu0
    %v493 = vadd.f32 %v292, %v492
    %v494 = vpop.f32.mrf.mxu0
    %v495 = vadd.f32 %v296, %v494
    %496 = vmatprep.mubr.f32.mxu0 0.0
    %497 = vmatmul.mubr.f32.gmra.mxu0 %v210
    %v498 = vpop.f32.mrf.mxu0
    %v499 = vadd.f32 %v292, %v498
    %v500 = vpop.f32.mrf.mxu0
    %v501 = vadd.f32 %v296, %v500
    %502 = vmatprep.mubr.f32.mxu0 0.0
    %503 = vmatmul.mubr.f32.gmra.mxu0 %v211
    %v504 = vpop.f32.mrf.mxu0
    %v505 = vadd.f32 %v292, %v504
    %v506 = vpop.f32.mrf.mxu0
    %v507 = vadd.f32 %v296, %v506
    %508 = vmatprep.mubr.f32.mxu0 0.0
    %509 = vmatmul.mubr.f32.gmra.mxu0 %v212
    %v510 = vpop.f32.mrf.mxu0
    %v511 = vadd.f32 %v292, %v510
    %v512 = vpop.f32.mrf.mxu0
    %v513 = vadd.f32 %v296, %v512
    %514 = vmatprep.mubr.f32.mxu0 0.0
    %515 = vmatmul.mubr.f32.gmra.mxu0 %v213
    %v516 = vpop.f32.mrf.mxu0
    %v517 = vadd.f32 %v292, %v516
    %v518 = vpop.f32.mrf.mxu0
    %v519 = vadd.f32 %v296, %v518
    %520 = vmatprep.mubr.f32.mxu0 0.0
    %521 = vmatmul.mubr.f32.gmra.mxu0 %v214
    %v522 = vpop.f32.mrf.mxu0
    %v523 = vadd.f32 %v292, %v522
    %v524 = vpop.f32.mrf.mxu0
    %v525 = vadd.f32 %v296, %v524
    %526 = vdwg.mxu0
    %527 = vst [vmem:[#allocation2] sm:$0xff] %v368
    %528 = vst [vmem:[#allocation2 + $0x8] sm:$0xff] %v370
    %529 = vst [vmem:[#allocation2 + $0x10] sm:$0xff] %v481
    %530 = vst [vmem:[#allocation2 + $0x18] sm:$0xff] %v483
    %531 = vst [vmem:[#allocation2 + $0x20] sm:$0xff] %v374
    %532 = vst [vmem:[#allocation2 + $0x28] sm:$0xff] %v376
    %533 = vst [vmem:[#allocation2 + $0x30] sm:$0xff] %v487
    %534 = vst [vmem:[#allocation2 + $0x38] sm:$0xff] %v489
    %535 = vst [vmem:[#allocation2 + $0x40] sm:$0xff] %v380
    %536 = vst [vmem:[#allocation2 + $0x48] sm:$0xff] %v382
    %537 = vst [vmem:[#allocation2 + $0x50] sm:$0xff] %v493
    %538 = vst [vmem:[#allocation2 + $0x58] sm:$0xff] %v495
    %539 = vst [vmem:[#allocation2 + $0x60] sm:$0xff] %v386
    %540 = vst [vmem:[#allocation2 + $0x68] sm:$0xff] %v388
    %541 = vst [vmem:[#allocation2 + $0x70] sm:$0xff] %v499
    %542 = vst [vmem:[#allocation2 + $0x78] sm:$0xff] %v501
    %543 = vst [vmem:[#allocation2 + $0x80] sm:$0xff] %v392
    %544 = vst [vmem:[#allocation2 + $0x88] sm:$0xff] %v394
    %545 = vst [vmem:[#allocation2 + $0x90] sm:$0xff] %v505
    %546 = vst [vmem:[#allocation2 + $0x98] sm:$0xff] %v507
    %547 = vst [vmem:[#allocation2 + $0xa0] sm:$0xff] %v398
    %548 = vst [vmem:[#allocation2 + $0xa8] sm:$0xff] %v400
    %549 = vst [vmem:[#allocation2 + $0xb0] sm:$0xff] %v511
    %550 = vst [vmem:[#allocation2 + $0xb8] sm:$0xff] %v513
    %551 = vst [vmem:[#allocation2 + $0xc0] sm:$0xff] %v404
    %552 = vst [vmem:[#allocation2 + $0xc8] sm:$0xff] %v406
    %553 = vst [vmem:[#allocation2 + $0xd0] sm:$0xff] %v517
    %554 = vst [vmem:[#allocation2 + $0xd8] sm:$0xff] %v519
    %555 = vst [vmem:[#allocation2 + $0xe0] sm:$0xff] %v410
    %556 = vst [vmem:[#allocation2 + $0xe8] sm:$0xff] %v412
    %557 = vst [vmem:[#allocation2 + $0xf0] sm:$0xff] %v523
    %558 = vst [vmem:[#allocation2 + $0xf8] sm:$0xff] %v525
    %v559 = vld [vmem:[#allocation4] sm:$0xff]
    %v560 = vld [vmem:[#allocation4 + $0x8] sm:$0xff]
    %v561 = vld [vmem:[#allocation4 + $0x10] sm:$0xff]
    %v562 = vld [vmem:[#allocation4 + $0x18] sm:$0xff]
    %v563 = vld [vmem:[#allocation4 + $0x20] sm:$0xff]
    %v564 = vld [vmem:[#allocation4 + $0x28] sm:$0xff]
    %v565 = vld [vmem:[#allocation4 + $0x30] sm:$0xff]
    %v566 = vld [vmem:[#allocation4 + $0x38] sm:$0xff]
    %v567 = vld [vmem:[#allocation4 + $0x40] sm:$0xff]
    %v568 = vld [vmem:[#allocation4 + $0x48] sm:$0xff]
    %v569 = vld [vmem:[#allocation4 + $0x50] sm:$0xff]
    %v570 = vld [vmem:[#allocation4 + $0x58] sm:$0xff]
    %v571 = vld [vmem:[#allocation4 + $0x60] sm:$0xff]
    %v572 = vld [vmem:[#allocation4 + $0x68] sm:$0xff]
    %v573 = vld [vmem:[#allocation4 + $0x70] sm:$0xff]
    %v574 = vld [vmem:[#allocation4 + $0x78] sm:$0xff]
    %v575 = vld [vmem:[#allocation4 + $0x80] sm:$0xff]
    %v576 = vld [vmem:[#allocation4 + $0x88] sm:$0xff]
    %v577 = vld [vmem:[#allocation4 + $0x90] sm:$0xff]
    %v578 = vld [vmem:[#allocation4 + $0x98] sm:$0xff]
    %v579 = vld [vmem:[#allocation4 + $0xa0] sm:$0xff]
    %v580 = vld [vmem:[#allocation4 + $0xa8] sm:$0xff]
    %v581 = vld [vmem:[#allocation4 + $0xb0] sm:$0xff]
    %v582 = vld [vmem:[#allocation4 + $0xb8] sm:$0xff]
    %v583 = vld [vmem:[#allocation4 + $0xc0] sm:$0xff]
    %v584 = vld [vmem:[#allocation4 + $0xc8] sm:$0xff]
    %v585 = vld [vmem:[#allocation4 + $0xd0] sm:$0xff]
    %v586 = vld [vmem:[#allocation4 + $0xd8] sm:$0xff]
    %v587 = vld [vmem:[#allocation4 + $0xe0] sm:$0xff]
    %v588 = vld [vmem:[#allocation4 + $0xe8] sm:$0xff]
    %v589 = vld [vmem:[#allocation4 + $0xf0] sm:$0xff]
    %v590 = vld [vmem:[#allocation4 + $0xf8] sm:$0xff]
    %v591 = vld [vmem:[#allocation4 + $0x100] sm:$0xff]
    %v592 = vld [vmem:[#allocation4 + $0x108] sm:$0xff]
    %v593 = vld [vmem:[#allocation4 + $0x110] sm:$0xff]
    %v594 = vld [vmem:[#allocation4 + $0x118] sm:$0xff]
    %v595 = vld [vmem:[#allocation4 + $0x120] sm:$0xff]
    %v596 = vld [vmem:[#allocation4 + $0x128] sm:$0xff]
    %v597 = vld [vmem:[#allocation4 + $0x130] sm:$0xff]
    %v598 = vld [vmem:[#allocation4 + $0x138] sm:$0xff]
    %v599 = vld [vmem:[#allocation4 + $0x140] sm:$0xff]
    %v600 = vld [vmem:[#allocation4 + $0x148] sm:$0xff]
    %v601 = vld [vmem:[#allocation4 + $0x150] sm:$0xff]
    %v602 = vld [vmem:[#allocation4 + $0x158] sm:$0xff]
    %v603 = vld [vmem:[#allocation4 + $0x160] sm:$0xff]
    %v604 = vld [vmem:[#allocation4 + $0x168] sm:$0xff]
    %v605 = vld [vmem:[#allocation4 + $0x170] sm:$0xff]
    %v606 = vld [vmem:[#allocation4 + $0x178] sm:$0xff]
    %v607 = vld [vmem:[#allocation4 + $0x180] sm:$0xff]
    %v608 = vld [vmem:[#allocation4 + $0x188] sm:$0xff]
    %v609 = vld [vmem:[#allocation4 + $0x190] sm:$0xff]
    %v610 = vld [vmem:[#allocation4 + $0x198] sm:$0xff]
    %v611 = vld [vmem:[#allocation4 + $0x1a0] sm:$0xff]
    %v612 = vld [vmem:[#allocation4 + $0x1a8] sm:$0xff]
    %v613 = vld [vmem:[#allocation4 + $0x1b0] sm:$0xff]
    %v614 = vld [vmem:[#allocation4 + $0x1b8] sm:$0xff]
    %v615 = vld [vmem:[#allocation4 + $0x1c0] sm:$0xff]
    %v616 = vld [vmem:[#allocation4 + $0x1c8] sm:$0xff]
    %v617 = vld [vmem:[#allocation4 + $0x1d0] sm:$0xff]
    %v618 = vld [vmem:[#allocation4 + $0x1d8] sm:$0xff]
    %v619 = vld [vmem:[#allocation4 + $0x1e0] sm:$0xff]
    %v620 = vld [vmem:[#allocation4 + $0x1e8] sm:$0xff]
    %v621 = vld [vmem:[#allocation4 + $0x1f0] sm:$0xff]
    %v622 = vld [vmem:[#allocation4 + $0x1f8] sm:$0xff]
    %v623 = vld [vmem:[%s11] sm:$0xff]
    %v624 = vld [vmem:[%s12] sm:$0xff]
    %s625 = smul.u32 0, 4
    %s626 = smul.addr %s625, 8
    %s627 = scalar_lea.vmem [#allocation2], %s626
    %v628 = vld [vmem:[%s627] sm:$0xff]
    %v629 = vld [vmem:[%s627 + $0x8] sm:$0xff]
    %v630 = vld [vmem:[%s627 + $0x10] sm:$0xff]
    %v631 = vld [vmem:[%s627 + $0x18] sm:$0xff]
    %632 = vmatprep.subr.mxu0 %v620
    %633 = vmatpush1.msra.mxu0 %v619
    %634 = vmatprep.subr.mxu0 %v616
    %635 = vmatpush1.msra.mxu0 %v615
    %636 = vmatprep.subr.mxu0 %v612
    %637 = vmatpush1.msra.mxu0 %v611
    %638 = vmatprep.subr.mxu0 %v608
    %639 = vmatpush1.msra.mxu0 %v607
    %640 = vmatprep.subr.mxu0 %v604
    %641 = vmatpush1.msra.mxu0 %v603
    %642 = vmatprep.subr.mxu0 %v600
    %643 = vmatpush1.msra.mxu0 %v599
    %644 = vmatprep.subr.mxu0 %v596
    %645 = vmatpush1.msra.mxu0 %v595
    %646 = vmatprep.subr.mxu0 %v592
    %647 = vmatpush1.msra.mxu0 %v591
    %648 = vmatprep.subr.mxu0 %v588
    %649 = vmatpush1.msra.mxu0 %v587
    %650 = vmatprep.subr.mxu0 %v584
    %651 = vmatpush1.msra.mxu0 %v583
    %652 = vmatprep.subr.mxu0 %v580
    %653 = vmatpush1.msra.mxu0 %v579
    %654 = vmatprep.subr.mxu0 %v576
    %655 = vmatpush1.msra.mxu0 %v575
    %656 = vmatprep.subr.mxu0 %v572
    %657 = vmatpush1.msra.mxu0 %v571
    %658 = vmatprep.subr.mxu0 %v568
    %659 = vmatpush1.msra.mxu0 %v567
    %660 = vmatprep.subr.mxu0 %v564
    %661 = vmatpush1.msra.mxu0 %v563
    %662 = vmatprep.subr.mxu0 %v560
    %663 = vmatpush1.msra.mxu0 %v559
    %664 = vmatprep.subr.mxu0 0.0
    %665 = vmatpush2.msra.mxu0 0.0
    %666 = vmatprep.subr.mxu0 0.0
    %667 = vmatpush2.msra.mxu0 0.0
    %668 = vmatprep.subr.mxu0 0.0
    %669 = vmatpush2.msra.mxu0 0.0
    %670 = vmatprep.subr.mxu0 0.0
    %671 = vmatpush2.msra.mxu0 0.0
    %672 = vmatprep.subr.mxu0 0.0
    %673 = vmatpush2.msra.mxu0 0.0
    %674 = vmatprep.subr.mxu0 0.0
    %675 = vmatpush2.msra.mxu0 0.0
    %676 = vmatprep.subr.mxu0 0.0
    %677 = vmatpush2.msra.mxu0 0.0
    %678 = vmatprep.subr.mxu0 0.0
    %679 = vmatpush2.msra.mxu0 0.0
    %680 = vmatprep.subr.mxu0 0.0
    %681 = vmatpush2.msra.mxu0 0.0
    %682 = vmatprep.subr.mxu0 0.0
    %683 = vmatpush2.msra.mxu0 0.0
    %684 = vmatprep.subr.mxu0 0.0
    %685 = vmatpush2.msra.mxu0 0.0
    %686 = vmatprep.subr.mxu0 0.0
    %687 = vmatpush2.msra.mxu0 0.0
    %688 = vmatprep.subr.mxu0 0.0
    %689 = vmatpush2.msra.mxu0 0.0
    %690 = vmatprep.subr.mxu0 0.0
    %691 = vmatpush2.msra.mxu0 0.0
    %692 = vmatprep.subr.mxu0 0.0
    %693 = vmatpush2.msra.mxu0 0.0
    %694 = vmatprep.subr.mxu0 0.0
    %695 = vmatpush2.msra.mxu0 0.0
    %696 = vmatprep.mubr.f32.mxu0 0.0
    %697 = vmatmul.mubr.f32.gmra.mxu0 %v623
    %v698 = vpop.f32.mrf.mxu0
    %v699 = vadd.f32 0.0, %v698
    %v700 = vpop.f32.mrf.mxu0
    %v701 = vadd.f32 0.0, %v700
    %702 = vdwg.mxu0
    %703 = vmatprep.subr.mxu0 %v622
    %704 = vmatpush1.msra.mxu0 %v621
    %705 = vmatprep.subr.mxu0 %v618
    %706 = vmatpush1.msra.mxu0 %v617
    %707 = vmatprep.subr.mxu0 %v614
    %708 = vmatpush1.msra.mxu0 %v613
    %709 = vmatprep.subr.mxu0 %v610
    %710 = vmatpush1.msra.mxu0 %v609
    %711 = vmatprep.subr.mxu0 %v606
    %712 = vmatpush1.msra.mxu0 %v605
    %713 = vmatprep.subr.mxu0 %v602
    %714 = vmatpush1.msra.mxu0 %v601
    %715 = vmatprep.subr.mxu0 %v598
    %716 = vmatpush1.msra.mxu0 %v597
    %717 = vmatprep.subr.mxu0 %v594
    %718 = vmatpush1.msra.mxu0 %v593
    %719 = vmatprep.subr.mxu0 %v590
    %720 = vmatpush1.msra.mxu0 %v589
    %721 = vmatprep.subr.mxu0 %v586
    %722 = vmatpush1.msra.mxu0 %v585
    %723 = vmatprep.subr.mxu0 %v582
    %724 = vmatpush1.msra.mxu0 %v581
    %725 = vmatprep.subr.mxu0 %v578
    %726 = vmatpush1.msra.mxu0 %v577
    %727 = vmatprep.subr.mxu0 %v574
    %728 = vmatpush1.msra.mxu0 %v573
    %729 = vmatprep.subr.mxu0 %v570
    %730 = vmatpush1.msra.mxu0 %v569
    %731 = vmatprep.subr.mxu0 %v566
    %732 = vmatpush1.msra.mxu0 %v565
    %733 = vmatprep.subr.mxu0 %v562
    %734 = vmatpush1.msra.mxu0 %v561
    %735 = vmatprep.subr.mxu0 0.0
    %736 = vmatpush2.msra.mxu0 0.0
    %737 = vmatprep.subr.mxu0 0.0
    %738 = vmatpush2.msra.mxu0 0.0
    %739 = vmatprep.subr.mxu0 0.0
    %740 = vmatpush2.msra.mxu0 0.0
    %741 = vmatprep.subr.mxu0 0.0
    %742 = vmatpush2.msra.mxu0 0.0
    %743 = vmatprep.subr.mxu0 0.0
    %744 = vmatpush2.msra.mxu0 0.0
    %745 = vmatprep.subr.mxu0 0.0
    %746 = vmatpush2.msra.mxu0 0.0
    %747 = vmatprep.subr.mxu0 0.0
    %748 = vmatpush2.msra.mxu0 0.0
    %749 = vmatprep.subr.mxu0 0.0
    %750 = vmatpush2.msra.mxu0 0.0
    %751 = vmatprep.subr.mxu0 0.0
    %752 = vmatpush2.msra.mxu0 0.0
    %753 = vmatprep.subr.mxu0 0.0
    %754 = vmatpush2.msra.mxu0 0.0
    %755 = vmatprep.subr.mxu0 0.0
    %756 = vmatpush2.msra.mxu0 0.0
    %757 = vmatprep.subr.mxu0 0.0
    %758 = vmatpush2.msra.mxu0 0.0
    %759 = vmatprep.subr.mxu0 0.0
    %760 = vmatpush2.msra.mxu0 0.0
    %761 = vmatprep.subr.mxu0 0.0
    %762 = vmatpush2.msra.mxu0 0.0
    %763 = vmatprep.subr.mxu0 0.0
    %764 = vmatpush2.msra.mxu0 0.0
    %765 = vmatprep.subr.mxu0 0.0
    %766 = vmatpush2.msra.mxu0 0.0
    %767 = vmatprep.mubr.f32.mxu0 0.0
    %768 = vmatmul.mubr.f32.gmra.mxu0 %v623
    %v769 = vpop.f32.mrf.mxu0
    %v770 = vadd.f32 0.0, %v769
    %v771 = vpop.f32.mrf.mxu0
    %v772 = vadd.f32 0.0, %v771
    %773 = vdwg.mxu0
    %v774 = vadd.f32 %v628, %v699
    %v775 = vadd.f32 %v629, %v701
    %v776 = vadd.f32 %v630, %v770
    %v777 = vadd.f32 %v631, %v772
    %v778 = vxor.u32 %v774, 2147483648
    %v779 = vmul.f32 %v778, 1.442695
    %v780 = vpow.pop %v779
    %v781 = vadd.f32 %v780, 1.0
    %v782 = vrcp.pop %v781
    %v783 = vmul.f32 1.0, %v782
    %v784 = vxor.u32 %v775, 2147483648
    %v785 = vmul.f32 %v784, 1.442695
    %v786 = vpow.pop %v785
    %v787 = vadd.f32 %v786, 1.0
    %v788 = vrcp.pop %v787
    %v789 = vmul.f32 1.0, %v788
    %v790 = vtanh.pop %v776
    %v791 = vxor.u32 %v777, 2147483648
    %v792 = vmul.f32 %v791, 1.442695
    %v793 = vpow.pop %v792
    %v794 = vadd.f32 %v793, 1.0
    %v795 = vrcp.pop %v794
    %v796 = vmul.f32 1.0, %v795
    %v797 = vmul.f32 %v789, %v624
    %v798 = vmul.f32 %v783, %v790
    %v799 = vadd.f32 %v797, %v798
    %v800 = vtanh.pop %v799
    %v801 = vmul.f32 %v796, %v800
    %802 = vst [vmem:[#allocation3] sm:$0xff] %v801
    %s803 = smul.u32 1, 4
    %s804 = smul.addr %s803, 8
    %s805 = scalar_lea.vmem [#allocation2], %s804
    %v806 = vld [vmem:[%s805] sm:$0xff]
    %v807 = vld [vmem:[%s805 + $0x8] sm:$0xff]
    %v808 = vld [vmem:[%s805 + $0x10] sm:$0xff]
    %v809 = vld [vmem:[%s805 + $0x18] sm:$0xff]
    %810 = vmatprep.subr.mxu0 %v620
    %811 = vmatpush1.msra.mxu0 %v619
    %812 = vmatprep.subr.mxu0 %v616
    %813 = vmatpush1.msra.mxu0 %v615
    %814 = vmatprep.subr.mxu0 %v612
    %815 = vmatpush1.msra.mxu0 %v611
    %816 = vmatprep.subr.mxu0 %v608
    %817 = vmatpush1.msra.mxu0 %v607
    %818 = vmatprep.subr.mxu0 %v604
    %819 = vmatpush1.msra.mxu0 %v603
    %820 = vmatprep.subr.mxu0 %v600
    %821 = vmatpush1.msra.mxu0 %v599
    %822 = vmatprep.subr.mxu0 %v596
    %823 = vmatpush1.msra.mxu0 %v595
    %824 = vmatprep.subr.mxu0 %v592
    %825 = vmatpush1.msra.mxu0 %v591
    %826 = vmatprep.subr.mxu0 %v588
    %827 = vmatpush1.msra.mxu0 %v587
    %828 = vmatprep.subr.mxu0 %v584
    %829 = vmatpush1.msra.mxu0 %v583
    %830 = vmatprep.subr.mxu0 %v580
    %831 = vmatpush1.msra.mxu0 %v579
    %832 = vmatprep.subr.mxu0 %v576
    %833 = vmatpush1.msra.mxu0 %v575
    %834 = vmatprep.subr.mxu0 %v572
    %835 = vmatpush1.msra.mxu0 %v571
    %836 = vmatprep.subr.mxu0 %v568
    %837 = vmatpush1.msra.mxu0 %v567
    %838 = vmatprep.subr.mxu0 %v564
    %839 = vmatpush1.msra.mxu0 %v563
    %840 = vmatprep.subr.mxu0 %v560
    %841 = vmatpush1.msra.mxu0 %v559
    %842 = vmatprep.subr.mxu0 0.0
    %843 = vmatpush2.msra.mxu0 0.0
    %844 = vmatprep.subr.mxu0 0.0
    %845 = vmatpush2.msra.mxu0 0.0
    %846 = vmatprep.subr.mxu0 0.0
    %847 = vmatpush2.msra.mxu0 0.0
    %848 = vmatprep.subr.mxu0 0.0
    %849 = vmatpush2.msra.mxu0 0.0
    %850 = vmatprep.subr.mxu0 0.0
    %851 = vmatpush2.msra.mxu0 0.0
    %852 = vmatprep.subr.mxu0 0.0
    %853 = vmatpush2.msra.mxu0 0.0
    %854 = vmatprep.subr.mxu0 0.0
    %855 = vmatpush2.msra.mxu0 0.0
    %856 = vmatprep.subr.mxu0 0.0
    %857 = vmatpush2.msra.mxu0 0.0
    %858 = vmatprep.subr.mxu0 0.0
    %859 = vmatpush2.msra.mxu0 0.0
    %860 = vmatprep.subr.mxu0 0.0
    %861 = vmatpush2.msra.mxu0 0.0
    %862 = vmatprep.subr.mxu0 0.0
    %863 = vmatpush2.msra.mxu0 0.0
    %864 = vmatprep.subr.mxu0 0.0
    %865 = vmatpush2.msra.mxu0 0.0
    %866 = vmatprep.subr.mxu0 0.0
    %867 = vmatpush2.msra.mxu0 0.0
    %868 = vmatprep.subr.mxu0 0.0
    %869 = vmatpush2.msra.mxu0 0.0
    %870 = vmatprep.subr.mxu0 0.0
    %871 = vmatpush2.msra.mxu0 0.0
    %872 = vmatprep.subr.mxu0 0.0
    %873 = vmatpush2.msra.mxu0 0.0
    %874 = vmatprep.mubr.f32.mxu0 0.0
    %875 = vmatmul.mubr.f32.gmra.mxu0 %v801
    %v876 = vpop.f32.mrf.mxu0
    %v877 = vadd.f32 0.0, %v876
    %v878 = vpop.f32.mrf.mxu0
    %v879 = vadd.f32 0.0, %v878
    %880 = vdwg.mxu0
    %881 = vmatprep.subr.mxu0 %v622
    %882 = vmatpush1.msra.mxu0 %v621
    %883 = vmatprep.subr.mxu0 %v618
    %884 = vmatpush1.msra.mxu0 %v617
    %885 = vmatprep.subr.mxu0 %v614
    %886 = vmatpush1.msra.mxu0 %v613
    %887 = vmatprep.subr.mxu0 %v610
    %888 = vmatpush1.msra.mxu0 %v609
    %889 = vmatprep.subr.mxu0 %v606
    %890 = vmatpush1.msra.mxu0 %v605
    %891 = vmatprep.subr.mxu0 %v602
    %892 = vmatpush1.msra.mxu0 %v601
    %893 = vmatprep.subr.mxu0 %v598
    %894 = vmatpush1.msra.mxu0 %v597
    %895 = vmatprep.subr.mxu0 %v594
    %896 = vmatpush1.msra.mxu0 %v593
    %897 = vmatprep.subr.mxu0 %v590
    %898 = vmatpush1.msra.mxu0 %v589
    %899 = vmatprep.subr.mxu0 %v586
    %900 = vmatpush1.msra.mxu0 %v585
    %901 = vmatprep.subr.mxu0 %v582
    %902 = vmatpush1.msra.mxu0 %v581
    %903 = vmatprep.subr.mxu0 %v578
    %904 = vmatpush1.msra.mxu0 %v577
    %905 = vmatprep.subr.mxu0 %v574
    %906 = vmatpush1.msra.mxu0 %v573
    %907 = vmatprep.subr.mxu0 %v570
    %908 = vmatpush1.msra.mxu0 %v569
    %909 = vmatprep.subr.mxu0 %v566
    %910 = vmatpush1.msra.mxu0 %v565
    %911 = vmatprep.subr.mxu0 %v562
    %912 = vmatpush1.msra.mxu0 %v561
    %913 = vmatprep.subr.mxu0 0.0
    %914 = vmatpush2.msra.mxu0 0.0
    %915 = vmatprep.subr.mxu0 0.0
    %916 = vmatpush2.msra.mxu0 0.0
    %917 = vmatprep.subr.mxu0 0.0
    %918 = vmatpush2.msra.mxu0 0.0
    %919 = vmatprep.subr.mxu0 0.0
    %920 = vmatpush2.msra.mxu0 0.0
    %921 = vmatprep.subr.mxu0 0.0
    %922 = vmatpush2.msra.mxu0 0.0
    %923 = vmatprep.subr.mxu0 0.0
    %924 = vmatpush2.msra.mxu0 0.0
    %925 = vmatprep.subr.mxu0 0.0
    %926 = vmatpush2.msra.mxu0 0.0
    %927 = vmatprep.subr.mxu0 0.0
    %928 = vmatpush2.msra.mxu0 0.0
    %929 = vmatprep.subr.mxu0 0.0
    %930 = vmatpush2.msra.mxu0 0.0
    %931 = vmatprep.subr.mxu0 0.0
    %932 = vmatpush2.msra.mxu0 0.0
    %933 = vmatprep.subr.mxu0 0.0
    %934 = vmatpush2.msra.mxu0 0.0
    %935 = vmatprep.subr.mxu0 0.0
    %936 = vmatpush2.msra.mxu0 0.0
    %937 = vmatprep.subr.mxu0 0.0
    %938 = vmatpush2.msra.mxu0 0.0
    %939 = vmatprep.subr.mxu0 0.0
    %940 = vmatpush2.msra.mxu0 0.0
    %941 = vmatprep.subr.mxu0 0.0
    %942 = vmatpush2.msra.mxu0 0.0
    %943 = vmatprep.subr.mxu0 0.0
    %944 = vmatpush2.msra.mxu0 0.0
    %945 = vmatprep.mubr.f32.mxu0 0.0
    %946 = vmatmul.mubr.f32.gmra.mxu0 %v801
    %v947 = vpop.f32.mrf.mxu0
    %v948 = vadd.f32 0.0, %v947
    %v949 = vpop.f32.mrf.mxu0
    %v950 = vadd.f32 0.0, %v949
    %951 = vdwg.mxu0
    %v952 = vadd.f32 %v806, %v877
    %v953 = vadd.f32 %v807, %v879
    %v954 = vadd.f32 %v808, %v948
    %v955 = vadd.f32 %v809, %v950
    %v956 = vxor.u32 %v952, 2147483648
    %v957 = vmul.f32 %v956, 1.442695
    %v958 = vpow.pop %v957
    %v959 = vadd.f32 %v958, 1.0
    %v960 = vrcp.pop %v959
    %v961 = vmul.f32 1.0, %v960
    %v962 = vxor.u32 %v953, 2147483648
    %v963 = vmul.f32 %v962, 1.442695
    %v964 = vpow.pop %v963
    %v965 = vadd.f32 %v964, 1.0
    %v966 = vrcp.pop %v965
    %v967 = vmul.f32 1.0, %v966
    %v968 = vtanh.pop %v954
    %v969 = vxor.u32 %v955, 2147483648
    %v970 = vmul.f32 %v969, 1.442695
    %v971 = vpow.pop %v970
    %v972 = vadd.f32 %v971, 1.0
    %v973 = vrcp.pop %v972
    %v974 = vmul.f32 1.0, %v973
    %v975 = vmul.f32 %v967, %v799
    %v976 = vmul.f32 %v961, %v968
    %v977 = vadd.f32 %v975, %v976
    %v978 = vtanh.pop %v977
    %v979 = vmul.f32 %v974, %v978
    %s980 = scalar_lea.vmem [#allocation3], 8
    %981 = vst [vmem:[%s980] sm:$0xff] %v979
    %s982 = smul.u32 2, 4
    %s983 = smul.addr %s982, 8
    %s984 = scalar_lea.vmem [#allocation2], %s983
    %v985 = vld [vmem:[%s984] sm:$0xff]
    %v986 = vld [vmem:[%s984 + $0x8] sm:$0xff]
    %v987 = vld [vmem:[%s984 + $0x10] sm:$0xff]
    %v988 = vld [vmem:[%s984 + $0x18] sm:$0xff]
    %989 = vmatprep.subr.mxu0 %v620
    %990 = vmatpush1.msra.mxu0 %v619
    %991 = vmatprep.subr.mxu0 %v616
    %992 = vmatpush1.msra.mxu0 %v615
    %993 = vmatprep.subr.mxu0 %v612
    %994 = vmatpush1.msra.mxu0 %v611
    %995 = vmatprep.subr.mxu0 %v608
    %996 = vmatpush1.msra.mxu0 %v607
    %997 = vmatprep.subr.mxu0 %v604
    %998 = vmatpush1.msra.mxu0 %v603
    %999 = vmatprep.subr.mxu0 %v600
    %1000 = vmatpush1.msra.mxu0 %v599
    %1001 = vmatprep.subr.mxu0 %v596
    %1002 = vmatpush1.msra.mxu0 %v595
    %1003 = vmatprep.subr.mxu0 %v592
    %1004 = vmatpush1.msra.mxu0 %v591
    %1005 = vmatprep.subr.mxu0 %v588
    %1006 = vmatpush1.msra.mxu0 %v587
    %1007 = vmatprep.subr.mxu0 %v584
    %1008 = vmatpush1.msra.mxu0 %v583
    %1009 = vmatprep.subr.mxu0 %v580
    %1010 = vmatpush1.msra.mxu0 %v579
    %1011 = vmatprep.subr.mxu0 %v576
    %1012 = vmatpush1.msra.mxu0 %v575
    %1013 = vmatprep.subr.mxu0 %v572
    %1014 = vmatpush1.msra.mxu0 %v571
    %1015 = vmatprep.subr.mxu0 %v568
    %1016 = vmatpush1.msra.mxu0 %v567
    %1017 = vmatprep.subr.mxu0 %v564
    %1018 = vmatpush1.msra.mxu0 %v563
    %1019 = vmatprep.subr.mxu0 %v560
    %1020 = vmatpush1.msra.mxu0 %v559
    %1021 = vmatprep.subr.mxu0 0.0
    %1022 = vmatpush2.msra.mxu0 0.0
    %1023 = vmatprep.subr.mxu0 0.0
    %1024 = vmatpush2.msra.mxu0 0.0
    %1025 = vmatprep.subr.mxu0 0.0
    %1026 = vmatpush2.msra.mxu0 0.0
    %1027 = vmatprep.subr.mxu0 0.0
    %1028 = vmatpush2.msra.mxu0 0.0
    %1029 = vmatprep.subr.mxu0 0.0
    %1030 = vmatpush2.msra.mxu0 0.0
    %1031 = vmatprep.subr.mxu0 0.0
    %1032 = vmatpush2.msra.mxu0 0.0
    %1033 = vmatprep.subr.mxu0 0.0
    %1034 = vmatpush2.msra.mxu0 0.0
    %1035 = vmatprep.subr.mxu0 0.0
    %1036 = vmatpush2.msra.mxu0 0.0
    %1037 = vmatprep.subr.mxu0 0.0
    %1038 = vmatpush2.msra.mxu0 0.0
    %1039 = vmatprep.subr.mxu0 0.0
    %1040 = vmatpush2.msra.mxu0 0.0
    %1041 = vmatprep.subr.mxu0 0.0
    %1042 = vmatpush2.msra.mxu0 0.0
    %1043 = vmatprep.subr.mxu0 0.0
    %1044 = vmatpush2.msra.mxu0 0.0
    %1045 = vmatprep.subr.mxu0 0.0
    %1046 = vmatpush2.msra.mxu0 0.0
    %1047 = vmatprep.subr.mxu0 0.0
    %1048 = vmatpush2.msra.mxu0 0.0
    %1049 = vmatprep.subr.mxu0 0.0
    %1050 = vmatpush2.msra.mxu0 0.0
    %1051 = vmatprep.subr.mxu0 0.0
    %1052 = vmatpush2.msra.mxu0 0.0
    %1053 = vmatprep.mubr.f32.mxu0 0.0
    %1054 = vmatmul.mubr.f32.gmra.mxu0 %v979
    %v1055 = vpop.f32.mrf.mxu0
    %v1056 = vadd.f32 0.0, %v1055
    %v1057 = vpop.f32.mrf.mxu0
    %v1058 = vadd.f32 0.0, %v1057
    %1059 = vdwg.mxu0
    %1060 = vmatprep.subr.mxu0 %v622
    %1061 = vmatpush1.msra.mxu0 %v621
    %1062 = vmatprep.subr.mxu0 %v618
    %1063 = vmatpush1.msra.mxu0 %v617
    %1064 = vmatprep.subr.mxu0 %v614
    %1065 = vmatpush1.msra.mxu0 %v613
    %1066 = vmatprep.subr.mxu0 %v610
    %1067 = vmatpush1.msra.mxu0 %v609
    %1068 = vmatprep.subr.mxu0 %v606
    %1069 = vmatpush1.msra.mxu0 %v605
    %1070 = vmatprep.subr.mxu0 %v602
    %1071 = vmatpush1.msra.mxu0 %v601
    %1072 = vmatprep.subr.mxu0 %v598
    %1073 = vmatpush1.msra.mxu0 %v597
    %1074 = vmatprep.subr.mxu0 %v594
    %1075 = vmatpush1.msra.mxu0 %v593
    %1076 = vmatprep.subr.mxu0 %v590
    %1077 = vmatpush1.msra.mxu0 %v589
    %1078 = vmatprep.subr.mxu0 %v586
    %1079 = vmatpush1.msra.mxu0 %v585
    %1080 = vmatprep.subr.mxu0 %v582
    %1081 = vmatpush1.msra.mxu0 %v581
    %1082 = vmatprep.subr.mxu0 %v578
    %1083 = vmatpush1.msra.mxu0 %v577
    %1084 = vmatprep.subr.mxu0 %v574
    %1085 = vmatpush1.msra.mxu0 %v573
    %1086 = vmatprep.subr.mxu0 %v570
    %1087 = vmatpush1.msra.mxu0 %v569
    %1088 = vmatprep.subr.mxu0 %v566
    %1089 = vmatpush1.msra.mxu0 %v565
    %1090 = vmatprep.subr.mxu0 %v562
    %1091 = vmatpush1.msra.mxu0 %v561
    %1092 = vmatprep.subr.mxu0 0.0
    %1093 = vmatpush2.msra.mxu0 0.0
    %1094 = vmatprep.subr.mxu0 0.0
    %1095 = vmatpush2.msra.mxu0 0.0
    %1096 = vmatprep.subr.mxu0 0.0
    %1097 = vmatpush2.msra.mxu0 0.0
    %1098 = vmatprep.subr.mxu0 0.0
    %1099 = vmatpush2.msra.mxu0 0.0
    %1100 = vmatprep.subr.mxu0 0.0
    %1101 = vmatpush2.msra.mxu0 0.0
    %1102 = vmatprep.subr.mxu0 0.0
    %1103 = vmatpush2.msra.mxu0 0.0
    %1104 = vmatprep.subr.mxu0 0.0
    %1105 = vmatpush2.msra.mxu0 0.0
    %1106 = vmatprep.subr.mxu0 0.0
    %1107 = vmatpush2.msra.mxu0 0.0
    %1108 = vmatprep.subr.mxu0 0.0
    %1109 = vmatpush2.msra.mxu0 0.0
    %1110 = vmatprep.subr.mxu0 0.0
    %1111 = vmatpush2.msra.mxu0 0.0
    %1112 = vmatprep.subr.mxu0 0.0
    %1113 = vmatpush2.msra.mxu0 0.0
    %1114 = vmatprep.subr.mxu0 0.0
    %1115 = vmatpush2.msra.mxu0 0.0
    %1116 = vmatprep.subr.mxu0 0.0
    %1117 = vmatpush2.msra.mxu0 0.0
    %1118 = vmatprep.subr.mxu0 0.0
    %1119 = vmatpush2.msra.mxu0 0.0
    %1120 = vmatprep.subr.mxu0 0.0
    %1121 = vmatpush2.msra.mxu0 0.0
    %1122 = vmatprep.subr.mxu0 0.0
    %1123 = vmatpush2.msra.mxu0 0.0
    %1124 = vmatprep.mubr.f32.mxu0 0.0
    %1125 = vmatmul.mubr.f32.gmra.mxu0 %v979
    %v1126 = vpop.f32.mrf.mxu0
    %v1127 = vadd.f32 0.0, %v1126
    %v1128 = vpop.f32.mrf.mxu0
    %v1129 = vadd.f32 0.0, %v1128
    %1130 = vdwg.mxu0
    %v1131 = vadd.f32 %v985, %v1056
    %v1132 = vadd.f32 %v986, %v1058
    %v1133 = vadd.f32 %v987, %v1127
    %v1134 = vadd.f32 %v988, %v1129
    %v1135 = vxor.u32 %v1131, 2147483648
    %v1136 = vmul.f32 %v1135, 1.442695
    %v1137 = vpow.pop %v1136
    %v1138 = vadd.f32 %v1137, 1.0
    %v1139 = vrcp.pop %v1138
    %v1140 = vmul.f32 1.0, %v1139
    %v1141 = vxor.u32 %v1132, 2147483648
    %v1142 = vmul.f32 %v1141, 1.442695
    %v1143 = vpow.pop %v1142
    %v1144 = vadd.f32 %v1143, 1.0
    %v1145 = vrcp.pop %v1144
    %v1146 = vmul.f32 1.0, %v1145
    %v1147 = vtanh.pop %v1133
    %v1148 = vxor.u32 %v1134, 2147483648
    %v1149 = vmul.f32 %v1148, 1.442695
    %v1150 = vpow.pop %v1149
    %v1151 = vadd.f32 %v1150, 1.0
    %v1152 = vrcp.pop %v1151
    %v1153 = vmul.f32 1.0, %v1152
    %v1154 = vmul.f32 %v1146, %v977
    %v1155 = vmul.f32 %v1140, %v1147
    %v1156 = vadd.f32 %v1154, %v1155
    %v1157 = vtanh.pop %v1156
    %v1158 = vmul.f32 %v1153, %v1157
    %s1159 = scalar_lea.vmem [#allocation3], 16
    %1160 = vst [vmem:[%s1159] sm:$0xff] %v1158
    %s1161 = smul.u32 3, 4
    %s1162 = smul.addr %s1161, 8
    %s1163 = scalar_lea.vmem [#allocation2], %s1162
    %v1164 = vld [vmem:[%s1163] sm:$0xff]
    %v1165 = vld [vmem:[%s1163 + $0x8] sm:$0xff]
    %v1166 = vld [vmem:[%s1163 + $0x10] sm:$0xff]
    %v1167 = vld [vmem:[%s1163 + $0x18] sm:$0xff]
    %1168 = vmatprep.subr.mxu0 %v620
    %1169 = vmatpush1.msra.mxu0 %v619
    %1170 = vmatprep.subr.mxu0 %v616
    %1171 = vmatpush1.msra.mxu0 %v615
    %1172 = vmatprep.subr.mxu0 %v612
    %1173 = vmatpush1.msra.mxu0 %v611
    %1174 = vmatprep.subr.mxu0 %v608
    %1175 = vmatpush1.msra.mxu0 %v607
    %1176 = vmatprep.subr.mxu0 %v604
    %1177 = vmatpush1.msra.mxu0 %v603
    %1178 = vmatprep.subr.mxu0 %v600
    %1179 = vmatpush1.msra.mxu0 %v599
    %1180 = vmatprep.subr.mxu0 %v596
    %1181 = vmatpush1.msra.mxu0 %v595
    %1182 = vmatprep.subr.mxu0 %v592
    %1183 = vmatpush1.msra.mxu0 %v591
    %1184 = vmatprep.subr.mxu0 %v588
    %1185 = vmatpush1.msra.mxu0 %v587
    %1186 = vmatprep.subr.mxu0 %v584
    %1187 = vmatpush1.msra.mxu0 %v583
    %1188 = vmatprep.subr.mxu0 %v580
    %1189 = vmatpush1.msra.mxu0 %v579
    %1190 = vmatprep.subr.mxu0 %v576
    %1191 = vmatpush1.msra.mxu0 %v575
    %1192 = vmatprep.subr.mxu0 %v572
    %1193 = vmatpush1.msra.mxu0 %v571
    %1194 = vmatprep.subr.mxu0 %v568
    %1195 = vmatpush1.msra.mxu0 %v567
    %1196 = vmatprep.subr.mxu0 %v564
    %1197 = vmatpush1.msra.mxu0 %v563
    %1198 = vmatprep.subr.mxu0 %v560
    %1199 = vmatpush1.msra.mxu0 %v559
    %1200 = vmatprep.subr.mxu0 0.0
    %1201 = vmatpush2.msra.mxu0 0.0
    %1202 = vmatprep.subr.mxu0 0.0
    %1203 = vmatpush2.msra.mxu0 0.0
    %1204 = vmatprep.subr.mxu0 0.0
    %1205 = vmatpush2.msra.mxu0 0.0
    %1206 = vmatprep.subr.mxu0 0.0
    %1207 = vmatpush2.msra.mxu0 0.0
    %1208 = vmatprep.subr.mxu0 0.0
    %1209 = vmatpush2.msra.mxu0 0.0
    %1210 = vmatprep.subr.mxu0 0.0
    %1211 = vmatpush2.msra.mxu0 0.0
    %1212 = vmatprep.subr.mxu0 0.0
    %1213 = vmatpush2.msra.mxu0 0.0
    %1214 = vmatprep.subr.mxu0 0.0
    %1215 = vmatpush2.msra.mxu0 0.0
    %1216 = vmatprep.subr.mxu0 0.0
    %1217 = vmatpush2.msra.mxu0 0.0
    %1218 = vmatprep.subr.mxu0 0.0
    %1219 = vmatpush2.msra.mxu0 0.0
    %1220 = vmatprep.subr.mxu0 0.0
    %1221 = vmatpush2.msra.mxu0 0.0
    %1222 = vmatprep.subr.mxu0 0.0
    %1223 = vmatpush2.msra.mxu0 0.0
    %1224 = vmatprep.subr.mxu0 0.0
    %1225 = vmatpush2.msra.mxu0 0.0
    %1226 = vmatprep.subr.mxu0 0.0
    %1227 = vmatpush2.msra.mxu0 0.0
    %1228 = vmatprep.subr.mxu0 0.0
    %1229 = vmatpush2.msra.mxu0 0.0
    %1230 = vmatprep.subr.mxu0 0.0
    %1231 = vmatpush2.msra.mxu0 0.0
    %1232 = vmatprep.mubr.f32.mxu0 0.0
    %1233 = vmatmul.mubr.f32.gmra.mxu0 %v1158
    %v1234 = vpop.f32.mrf.mxu0
    %v1235 = vadd.f32 0.0, %v1234
    %v1236 = vpop.f32.mrf.mxu0
    %v1237 = vadd.f32 0.0, %v1236
    %1238 = vdwg.mxu0
    %1239 = vmatprep.subr.mxu0 %v622
    %1240 = vmatpush1.msra.mxu0 %v621
    %1241 = vmatprep.subr.mxu0 %v618
    %1242 = vmatpush1.msra.mxu0 %v617
    %1243 = vmatprep.subr.mxu0 %v614
    %1244 = vmatpush1.msra.mxu0 %v613
    %1245 = vmatprep.subr.mxu0 %v610
    %1246 = vmatpush1.msra.mxu0 %v609
    %1247 = vmatprep.subr.mxu0 %v606
    %1248 = vmatpush1.msra.mxu0 %v605
    %1249 = vmatprep.subr.mxu0 %v602
    %1250 = vmatpush1.msra.mxu0 %v601
    %1251 = vmatprep.subr.mxu0 %v598
    %1252 = vmatpush1.msra.mxu0 %v597
    %1253 = vmatprep.subr.mxu0 %v594
    %1254 = vmatpush1.msra.mxu0 %v593
    %1255 = vmatprep.subr.mxu0 %v590
    %1256 = vmatpush1.msra.mxu0 %v589
    %1257 = vmatprep.subr.mxu0 %v586
    %1258 = vmatpush1.msra.mxu0 %v585
    %1259 = vmatprep.subr.mxu0 %v582
    %1260 = vmatpush1.msra.mxu0 %v581
    %1261 = vmatprep.subr.mxu0 %v578
    %1262 = vmatpush1.msra.mxu0 %v577
    %1263 = vmatprep.subr.mxu0 %v574
    %1264 = vmatpush1.msra.mxu0 %v573
    %1265 = vmatprep.subr.mxu0 %v570
    %1266 = vmatpush1.msra.mxu0 %v569
    %1267 = vmatprep.subr.mxu0 %v566
    %1268 = vmatpush1.msra.mxu0 %v565
    %1269 = vmatprep.subr.mxu0 %v562
    %1270 = vmatpush1.msra.mxu0 %v561
    %1271 = vmatprep.subr.mxu0 0.0
    %1272 = vmatpush2.msra.mxu0 0.0
    %1273 = vmatprep.subr.mxu0 0.0
    %1274 = vmatpush2.msra.mxu0 0.0
    %1275 = vmatprep.subr.mxu0 0.0
    %1276 = vmatpush2.msra.mxu0 0.0
    %1277 = vmatprep.subr.mxu0 0.0
    %1278 = vmatpush2.msra.mxu0 0.0
    %1279 = vmatprep.subr.mxu0 0.0
    %1280 = vmatpush2.msra.mxu0 0.0
    %1281 = vmatprep.subr.mxu0 0.0
    %1282 = vmatpush2.msra.mxu0 0.0
    %1283 = vmatprep.subr.mxu0 0.0
    %1284 = vmatpush2.msra.mxu0 0.0
    %1285 = vmatprep.subr.mxu0 0.0
    %1286 = vmatpush2.msra.mxu0 0.0
    %1287 = vmatprep.subr.mxu0 0.0
    %1288 = vmatpush2.msra.mxu0 0.0
    %1289 = vmatprep.subr.mxu0 0.0
    %1290 = vmatpush2.msra.mxu0 0.0
    %1291 = vmatprep.subr.mxu0 0.0
    %1292 = vmatpush2.msra.mxu0 0.0
    %1293 = vmatprep.subr.mxu0 0.0
    %1294 = vmatpush2.msra.mxu0 0.0
    %1295 = vmatprep.subr.mxu0 0.0
    %1296 = vmatpush2.msra.mxu0 0.0
    %1297 = vmatprep.subr.mxu0 0.0
    %1298 = vmatpush2.msra.mxu0 0.0
    %1299 = vmatprep.subr.mxu0 0.0
    %1300 = vmatpush2.msra.mxu0 0.0
    %1301 = vmatprep.subr.mxu0 0.0
    %1302 = vmatpush2.msra.mxu0 0.0
    %1303 = vmatprep.mubr.f32.mxu0 0.0
    %1304 = vmatmul.mubr.f32.gmra.mxu0 %v1158
    %v1305 = vpop.f32.mrf.mxu0
    %v1306 = vadd.f32 0.0, %v1305
    %v1307 = vpop.f32.mrf.mxu0
    %v1308 = vadd.f32 0.0, %v1307
    %1309 = vdwg.mxu0
    %v1310 = vadd.f32 %v1164, %v1235
    %v1311 = vadd.f32 %v1165, %v1237
    %v1312 = vadd.f32 %v1166, %v1306
    %v1313 = vadd.f32 %v1167, %v1308
    %v1314 = vxor.u32 %v1310, 2147483648
    %v1315 = vmul.f32 %v1314, 1.442695
    %v1316 = vpow.pop %v1315
    %v1317 = vadd.f32 %v1316, 1.0
    %v1318 = vrcp.pop %v1317
    %v1319 = vmul.f32 1.0, %v1318
    %v1320 = vxor.u32 %v1311, 2147483648
    %v1321 = vmul.f32 %v1320, 1.442695
    %v1322 = vpow.pop %v1321
    %v1323 = vadd.f32 %v1322, 1.0
    %v1324 = vrcp.pop %v1323
    %v1325 = vmul.f32 1.0, %v1324
    %v1326 = vtanh.pop %v1312
    %v1327 = vxor.u32 %v1313, 2147483648
    %v1328 = vmul.f32 %v1327, 1.442695
    %v1329 = vpow.pop %v1328
    %v1330 = vadd.f32 %v1329, 1.0
    %v1331 = vrcp.pop %v1330
    %v1332 = vmul.f32 1.0, %v1331
    %v1333 = vmul.f32 %v1325, %v1156
    %v1334 = vmul.f32 %v1319, %v1326
    %v1335 = vadd.f32 %v1333, %v1334
    %v1336 = vtanh.pop %v1335
    %v1337 = vmul.f32 %v1332, %v1336
    %s1338 = scalar_lea.vmem [#allocation3], 24
    %1339 = vst [vmem:[%s1338] sm:$0xff] %v1337
    %s1340 = smul.u32 4, 4
    %s1341 = smul.addr %s1340, 8
    %s1342 = scalar_lea.vmem [#allocation2], %s1341
    %v1343 = vld [vmem:[%s1342] sm:$0xff]
    %v1344 = vld [vmem:[%s1342 + $0x8] sm:$0xff]
    %v1345 = vld [vmem:[%s1342 + $0x10] sm:$0xff]
    %v1346 = vld [vmem:[%s1342 + $0x18] sm:$0xff]
    %1347 = vmatprep.subr.mxu0 %v620
    %1348 = vmatpush1.msra.mxu0 %v619
    %1349 = vmatprep.subr.mxu0 %v616
    %1350 = vmatpush1.msra.mxu0 %v615
    %1351 = vmatprep.subr.mxu0 %v612
    %1352 = vmatpush1.msra.mxu0 %v611
    %1353 = vmatprep.subr.mxu0 %v608
    %1354 = vmatpush1.msra.mxu0 %v607
    %1355 = vmatprep.subr.mxu0 %v604
    %1356 = vmatpush1.msra.mxu0 %v603
    %1357 = vmatprep.subr.mxu0 %v600
    %1358 = vmatpush1.msra.mxu0 %v599
    %1359 = vmatprep.subr.mxu0 %v596
    %1360 = vmatpush1.msra.mxu0 %v595
    %1361 = vmatprep.subr.mxu0 %v592
    %1362 = vmatpush1.msra.mxu0 %v591
    %1363 = vmatprep.subr.mxu0 %v588
    %1364 = vmatpush1.msra.mxu0 %v587
    %1365 = vmatprep.subr.mxu0 %v584
    %1366 = vmatpush1.msra.mxu0 %v583
    %1367 = vmatprep.subr.mxu0 %v580
    %1368 = vmatpush1.msra.mxu0 %v579
    %1369 = vmatprep.subr.mxu0 %v576
    %1370 = vmatpush1.msra.mxu0 %v575
    %1371 = vmatprep.subr.mxu0 %v572
    %1372 = vmatpush1.msra.mxu0 %v571
    %1373 = vmatprep.subr.mxu0 %v568
    %1374 = vmatpush1.msra.mxu0 %v567
    %1375 = vmatprep.subr.mxu0 %v564
    %1376 = vmatpush1.msra.mxu0 %v563
    %1377 = vmatprep.subr.mxu0 %v560
    %1378 = vmatpush1.msra.mxu0 %v559
    %1379 = vmatprep.subr.mxu0 0.0
    %1380 = vmatpush2.msra.mxu0 0.0
    %1381 = vmatprep.subr.mxu0 0.0
    %1382 = vmatpush2.msra.mxu0 0.0
    %1383 = vmatprep.subr.mxu0 0.0
    %1384 = vmatpush2.msra.mxu0 0.0
    %1385 = vmatprep.subr.mxu0 0.0
    %1386 = vmatpush2.msra.mxu0 0.0
    %1387 = vmatprep.subr.mxu0 0.0
    %1388 = vmatpush2.msra.mxu0 0.0
    %1389 = vmatprep.subr.mxu0 0.0
    %1390 = vmatpush2.msra.mxu0 0.0
    %1391 = vmatprep.subr.mxu0 0.0
    %1392 = vmatpush2.msra.mxu0 0.0
    %1393 = vmatprep.subr.mxu0 0.0
    %1394 = vmatpush2.msra.mxu0 0.0
    %1395 = vmatprep.subr.mxu0 0.0
    %1396 = vmatpush2.msra.mxu0 0.0
    %1397 = vmatprep.subr.mxu0 0.0
    %1398 = vmatpush2.msra.mxu0 0.0
    %1399 = vmatprep.subr.mxu0 0.0
    %1400 = vmatpush2.msra.mxu0 0.0
    %1401 = vmatprep.subr.mxu0 0.0
    %1402 = vmatpush2.msra.mxu0 0.0
    %1403 = vmatprep.subr.mxu0 0.0
    %1404 = vmatpush2.msra.mxu0 0.0
    %1405 = vmatprep.subr.mxu0 0.0
    %1406 = vmatpush2.msra.mxu0 0.0
    %1407 = vmatprep.subr.mxu0 0.0
    %1408 = vmatpush2.msra.mxu0 0.0
    %1409 = vmatprep.subr.mxu0 0.0
    %1410 = vmatpush2.msra.mxu0 0.0
    %1411 = vmatprep.mubr.f32.mxu0 0.0
    %1412 = vmatmul.mubr.f32.gmra.mxu0 %v1337
    %v1413 = vpop.f32.mrf.mxu0
    %v1414 = vadd.f32 0.0, %v1413
    %v1415 = vpop.f32.mrf.mxu0
    %v1416 = vadd.f32 0.0, %v1415
    %1417 = vdwg.mxu0
    %1418 = vmatprep.subr.mxu0 %v622
    %1419 = vmatpush1.msra.mxu0 %v621
    %1420 = vmatprep.subr.mxu0 %v618
    %1421 = vmatpush1.msra.mxu0 %v617
    %1422 = vmatprep.subr.mxu0 %v614
    %1423 = vmatpush1.msra.mxu0 %v613
    %1424 = vmatprep.subr.mxu0 %v610
    %1425 = vmatpush1.msra.mxu0 %v609
    %1426 = vmatprep.subr.mxu0 %v606
    %1427 = vmatpush1.msra.mxu0 %v605
    %1428 = vmatprep.subr.mxu0 %v602
    %1429 = vmatpush1.msra.mxu0 %v601
    %1430 = vmatprep.subr.mxu0 %v598
    %1431 = vmatpush1.msra.mxu0 %v597
    %1432 = vmatprep.subr.mxu0 %v594
    %1433 = vmatpush1.msra.mxu0 %v593
    %1434 = vmatprep.subr.mxu0 %v590
    %1435 = vmatpush1.msra.mxu0 %v589
    %1436 = vmatprep.subr.mxu0 %v586
    %1437 = vmatpush1.msra.mxu0 %v585
    %1438 = vmatprep.subr.mxu0 %v582
    %1439 = vmatpush1.msra.mxu0 %v581
    %1440 = vmatprep.subr.mxu0 %v578
    %1441 = vmatpush1.msra.mxu0 %v577
    %1442 = vmatprep.subr.mxu0 %v574
    %1443 = vmatpush1.msra.mxu0 %v573
    %1444 = vmatprep.subr.mxu0 %v570
    %1445 = vmatpush1.msra.mxu0 %v569
    %1446 = vmatprep.subr.mxu0 %v566
    %1447 = vmatpush1.msra.mxu0 %v565
    %1448 = vmatprep.subr.mxu0 %v562
    %1449 = vmatpush1.msra.mxu0 %v561
    %1450 = vmatprep.subr.mxu0 0.0
    %1451 = vmatpush2.msra.mxu0 0.0
    %1452 = vmatprep.subr.mxu0 0.0
    %1453 = vmatpush2.msra.mxu0 0.0
    %1454 = vmatprep.subr.mxu0 0.0
    %1455 = vmatpush2.msra.mxu0 0.0
    %1456 = vmatprep.subr.mxu0 0.0
    %1457 = vmatpush2.msra.mxu0 0.0
    %1458 = vmatprep.subr.mxu0 0.0
    %1459 = vmatpush2.msra.mxu0 0.0
    %1460 = vmatprep.subr.mxu0 0.0
    %1461 = vmatpush2.msra.mxu0 0.0
    %1462 = vmatprep.subr.mxu0 0.0
    %1463 = vmatpush2.msra.mxu0 0.0
    %1464 = vmatprep.subr.mxu0 0.0
    %1465 = vmatpush2.msra.mxu0 0.0
    %1466 = vmatprep.subr.mxu0 0.0
    %1467 = vmatpush2.msra.mxu0 0.0
    %1468 = vmatprep.subr.mxu0 0.0
    %1469 = vmatpush2.msra.mxu0 0.0
    %1470 = vmatprep.subr.mxu0 0.0
    %1471 = vmatpush2.msra.mxu0 0.0
    %1472 = vmatprep.subr.mxu0 0.0
    %1473 = vmatpush2.msra.mxu0 0.0
    %1474 = vmatprep.subr.mxu0 0.0
    %1475 = vmatpush2.msra.mxu0 0.0
    %1476 = vmatprep.subr.mxu0 0.0
    %1477 = vmatpush2.msra.mxu0 0.0
    %1478 = vmatprep.subr.mxu0 0.0
    %1479 = vmatpush2.msra.mxu0 0.0
    %1480 = vmatprep.subr.mxu0 0.0
    %1481 = vmatpush2.msra.mxu0 0.0
    %1482 = vmatprep.mubr.f32.mxu0 0.0
    %1483 = vmatmul.mubr.f32.gmra.mxu0 %v1337
    %v1484 = vpop.f32.mrf.mxu0
    %v1485 = vadd.f32 0.0, %v1484
    %v1486 = vpop.f32.mrf.mxu0
    %v1487 = vadd.f32 0.0, %v1486
    %1488 = vdwg.mxu0
    %v1489 = vadd.f32 %v1343, %v1414
    %v1490 = vadd.f32 %v1344, %v1416
    %v1491 = vadd.f32 %v1345, %v1485
    %v1492 = vadd.f32 %v1346, %v1487
    %v1493 = vxor.u32 %v1489, 2147483648
    %v1494 = vmul.f32 %v1493, 1.442695
    %v1495 = vpow.pop %v1494
    %v1496 = vadd.f32 %v1495, 1.0
    %v1497 = vrcp.pop %v1496
    %v1498 = vmul.f32 1.0, %v1497
    %v1499 = vxor.u32 %v1490, 2147483648
    %v1500 = vmul.f32 %v1499, 1.442695
    %v1501 = vpow.pop %v1500
    %v1502 = vadd.f32 %v1501, 1.0
    %v1503 = vrcp.pop %v1502
    %v1504 = vmul.f32 1.0, %v1503
    %v1505 = vtanh.pop %v1491
    %v1506 = vxor.u32 %v1492, 2147483648
    %v1507 = vmul.f32 %v1506, 1.442695
    %v1508 = vpow.pop %v1507
    %v1509 = vadd.f32 %v1508, 1.0
    %v1510 = vrcp.pop %v1509
    %v1511 = vmul.f32 1.0, %v1510
    %v1512 = vmul.f32 %v1504, %v1335
    %v1513 = vmul.f32 %v1498, %v1505
    %v1514 = vadd.f32 %v1512, %v1513
    %v1515 = vtanh.pop %v1514
    %v1516 = vmul.f32 %v1511, %v1515
    %s1517 = scalar_lea.vmem [#allocation3], 32
    %1518 = vst [vmem:[%s1517] sm:$0xff] %v1516
    %s1519 = smul.u32 5, 4
    %s1520 = smul.addr %s1519, 8
    %s1521 = scalar_lea.vmem [#allocation2], %s1520
    %v1522 = vld [vmem:[%s1521] sm:$0xff]
    %v1523 = vld [vmem:[%s1521 + $0x8] sm:$0xff]
    %v1524 = vld [vmem:[%s1521 + $0x10] sm:$0xff]
    %v1525 = vld [vmem:[%s1521 + $0x18] sm:$0xff]
    %1526 = vmatprep.subr.mxu0 %v620
    %1527 = vmatpush1.msra.mxu0 %v619
    %1528 = vmatprep.subr.mxu0 %v616
    %1529 = vmatpush1.msra.mxu0 %v615
    %1530 = vmatprep.subr.mxu0 %v612
    %1531 = vmatpush1.msra.mxu0 %v611
    %1532 = vmatprep.subr.mxu0 %v608
    %1533 = vmatpush1.msra.mxu0 %v607
    %1534 = vmatprep.subr.mxu0 %v604
    %1535 = vmatpush1.msra.mxu0 %v603
    %1536 = vmatprep.subr.mxu0 %v600
    %1537 = vmatpush1.msra.mxu0 %v599
    %1538 = vmatprep.subr.mxu0 %v596
    %1539 = vmatpush1.msra.mxu0 %v595
    %1540 = vmatprep.subr.mxu0 %v592
    %1541 = vmatpush1.msra.mxu0 %v591
    %1542 = vmatprep.subr.mxu0 %v588
    %1543 = vmatpush1.msra.mxu0 %v587
    %1544 = vmatprep.subr.mxu0 %v584
    %1545 = vmatpush1.msra.mxu0 %v583
    %1546 = vmatprep.subr.mxu0 %v580
    %1547 = vmatpush1.msra.mxu0 %v579
    %1548 = vmatprep.subr.mxu0 %v576
    %1549 = vmatpush1.msra.mxu0 %v575
    %1550 = vmatprep.subr.mxu0 %v572
    %1551 = vmatpush1.msra.mxu0 %v571
    %1552 = vmatprep.subr.mxu0 %v568
    %1553 = vmatpush1.msra.mxu0 %v567
    %1554 = vmatprep.subr.mxu0 %v564
    %1555 = vmatpush1.msra.mxu0 %v563
    %1556 = vmatprep.subr.mxu0 %v560
    %1557 = vmatpush1.msra.mxu0 %v559
    %1558 = vmatprep.subr.mxu0 0.0
    %1559 = vmatpush2.msra.mxu0 0.0
    %1560 = vmatprep.subr.mxu0 0.0
    %1561 = vmatpush2.msra.mxu0 0.0
    %1562 = vmatprep.subr.mxu0 0.0
    %1563 = vmatpush2.msra.mxu0 0.0
    %1564 = vmatprep.subr.mxu0 0.0
    %1565 = vmatpush2.msra.mxu0 0.0
    %1566 = vmatprep.subr.mxu0 0.0
    %1567 = vmatpush2.msra.mxu0 0.0
    %1568 = vmatprep.subr.mxu0 0.0
    %1569 = vmatpush2.msra.mxu0 0.0
    %1570 = vmatprep.subr.mxu0 0.0
    %1571 = vmatpush2.msra.mxu0 0.0
    %1572 = vmatprep.subr.mxu0 0.0
    %1573 = vmatpush2.msra.mxu0 0.0
    %1574 = vmatprep.subr.mxu0 0.0
    %1575 = vmatpush2.msra.mxu0 0.0
    %1576 = vmatprep.subr.mxu0 0.0
    %1577 = vmatpush2.msra.mxu0 0.0
    %1578 = vmatprep.subr.mxu0 0.0
    %1579 = vmatpush2.msra.mxu0 0.0
    %1580 = vmatprep.subr.mxu0 0.0
    %1581 = vmatpush2.msra.mxu0 0.0
    %1582 = vmatprep.subr.mxu0 0.0
    %1583 = vmatpush2.msra.mxu0 0.0
    %1584 = vmatprep.subr.mxu0 0.0
    %1585 = vmatpush2.msra.mxu0 0.0
    %1586 = vmatprep.subr.mxu0 0.0
    %1587 = vmatpush2.msra.mxu0 0.0
    %1588 = vmatprep.subr.mxu0 0.0
    %1589 = vmatpush2.msra.mxu0 0.0
    %1590 = vmatprep.mubr.f32.mxu0 0.0
    %1591 = vmatmul.mubr.f32.gmra.mxu0 %v1516
    %v1592 = vpop.f32.mrf.mxu0
    %v1593 = vadd.f32 0.0, %v1592
    %v1594 = vpop.f32.mrf.mxu0
    %v1595 = vadd.f32 0.0, %v1594
    %1596 = vdwg.mxu0
    %1597 = vmatprep.subr.mxu0 %v622
    %1598 = vmatpush1.msra.mxu0 %v621
    %1599 = vmatprep.subr.mxu0 %v618
    %1600 = vmatpush1.msra.mxu0 %v617
    %1601 = vmatprep.subr.mxu0 %v614
    %1602 = vmatpush1.msra.mxu0 %v613
    %1603 = vmatprep.subr.mxu0 %v610
    %1604 = vmatpush1.msra.mxu0 %v609
    %1605 = vmatprep.subr.mxu0 %v606
    %1606 = vmatpush1.msra.mxu0 %v605
    %1607 = vmatprep.subr.mxu0 %v602
    %1608 = vmatpush1.msra.mxu0 %v601
    %1609 = vmatprep.subr.mxu0 %v598
    %1610 = vmatpush1.msra.mxu0 %v597
    %1611 = vmatprep.subr.mxu0 %v594
    %1612 = vmatpush1.msra.mxu0 %v593
    %1613 = vmatprep.subr.mxu0 %v590
    %1614 = vmatpush1.msra.mxu0 %v589
    %1615 = vmatprep.subr.mxu0 %v586
    %1616 = vmatpush1.msra.mxu0 %v585
    %1617 = vmatprep.subr.mxu0 %v582
    %1618 = vmatpush1.msra.mxu0 %v581
    %1619 = vmatprep.subr.mxu0 %v578
    %1620 = vmatpush1.msra.mxu0 %v577
    %1621 = vmatprep.subr.mxu0 %v574
    %1622 = vmatpush1.msra.mxu0 %v573
    %1623 = vmatprep.subr.mxu0 %v570
    %1624 = vmatpush1.msra.mxu0 %v569
    %1625 = vmatprep.subr.mxu0 %v566
    %1626 = vmatpush1.msra.mxu0 %v565
    %1627 = vmatprep.subr.mxu0 %v562
    %1628 = vmatpush1.msra.mxu0 %v561
    %1629 = vmatprep.subr.mxu0 0.0
    %1630 = vmatpush2.msra.mxu0 0.0
    %1631 = vmatprep.subr.mxu0 0.0
    %1632 = vmatpush2.msra.mxu0 0.0
    %1633 = vmatprep.subr.mxu0 0.0
    %1634 = vmatpush2.msra.mxu0 0.0
    %1635 = vmatprep.subr.mxu0 0.0
    %1636 = vmatpush2.msra.mxu0 0.0
    %1637 = vmatprep.subr.mxu0 0.0
    %1638 = vmatpush2.msra.mxu0 0.0
    %1639 = vmatprep.subr.mxu0 0.0
    %1640 = vmatpush2.msra.mxu0 0.0
    %1641 = vmatprep.subr.mxu0 0.0
    %1642 = vmatpush2.msra.mxu0 0.0
    %1643 = vmatprep.subr.mxu0 0.0
    %1644 = vmatpush2.msra.mxu0 0.0
    %1645 = vmatprep.subr.mxu0 0.0
    %1646 = vmatpush2.msra.mxu0 0.0
    %1647 = vmatprep.subr.mxu0 0.0
    %1648 = vmatpush2.msra.mxu0 0.0
    %1649 = vmatprep.subr.mxu0 0.0
    %1650 = vmatpush2.msra.mxu0 0.0
    %1651 = vmatprep.subr.mxu0 0.0
    %1652 = vmatpush2.msra.mxu0 0.0
    %1653 = vmatprep.subr.mxu0 0.0
    %1654 = vmatpush2.msra.mxu0 0.0
    %1655 = vmatprep.subr.mxu0 0.0
    %1656 = vmatpush2.msra.mxu0 0.0
    %1657 = vmatprep.subr.mxu0 0.0
    %1658 = vmatpush2.msra.mxu0 0.0
    %1659 = vmatprep.subr.mxu0 0.0
    %1660 = vmatpush2.msra.mxu0 0.0
    %1661 = vmatprep.mubr.f32.mxu0 0.0
    %1662 = vmatmul.mubr.f32.gmra.mxu0 %v1516
    %v1663 = vpop.f32.mrf.mxu0
    %v1664 = vadd.f32 0.0, %v1663
    %v1665 = vpop.f32.mrf.mxu0
    %v1666 = vadd.f32 0.0, %v1665
    %1667 = vdwg.mxu0
    %v1668 = vadd.f32 %v1522, %v1593
    %v1669 = vadd.f32 %v1523, %v1595
    %v1670 = vadd.f32 %v1524, %v1664
    %v1671 = vadd.f32 %v1525, %v1666
    %v1672 = vxor.u32 %v1668, 2147483648
    %v1673 = vmul.f32 %v1672, 1.442695
    %v1674 = vpow.pop %v1673
    %v1675 = vadd.f32 %v1674, 1.0
    %v1676 = vrcp.pop %v1675
    %v1677 = vmul.f32 1.0, %v1676
    %v1678 = vxor.u32 %v1669, 2147483648
    %v1679 = vmul.f32 %v1678, 1.442695
    %v1680 = vpow.pop %v1679
    %v1681 = vadd.f32 %v1680, 1.0
    %v1682 = vrcp.pop %v1681
    %v1683 = vmul.f32 1.0, %v1682
    %v1684 = vtanh.pop %v1670
    %v1685 = vxor.u32 %v1671, 2147483648
    %v1686 = vmul.f32 %v1685, 1.442695
    %v1687 = vpow.pop %v1686
    %v1688 = vadd.f32 %v1687, 1.0
    %v1689 = vrcp.pop %v1688
    %v1690 = vmul.f32 1.0, %v1689
    %v1691 = vmul.f32 %v1683, %v1514
    %v1692 = vmul.f32 %v1677, %v1684
    %v1693 = vadd.f32 %v1691, %v1692
    %v1694 = vtanh.pop %v1693
    %v1695 = vmul.f32 %v1690, %v1694
    %s1696 = scalar_lea.vmem [#allocation3], 40
    %1697 = vst [vmem:[%s1696] sm:$0xff] %v1695
    %s1698 = smul.u32 6, 4
    %s1699 = smul.addr %s1698, 8
    %s1700 = scalar_lea.vmem [#allocation2], %s1699
    %v1701 = vld [vmem:[%s1700] sm:$0xff]
    %v1702 = vld [vmem:[%s1700 + $0x8] sm:$0xff]
    %v1703 = vld [vmem:[%s1700 + $0x10] sm:$0xff]
    %v1704 = vld [vmem:[%s1700 + $0x18] sm:$0xff]
    %1705 = vmatprep.subr.mxu0 %v620
    %1706 = vmatpush1.msra.mxu0 %v619
    %1707 = vmatprep.subr.mxu0 %v616
    %1708 = vmatpush1.msra.mxu0 %v615
    %1709 = vmatprep.subr.mxu0 %v612
    %1710 = vmatpush1.msra.mxu0 %v611
    %1711 = vmatprep.subr.mxu0 %v608
    %1712 = vmatpush1.msra.mxu0 %v607
    %1713 = vmatprep.subr.mxu0 %v604
    %1714 = vmatpush1.msra.mxu0 %v603
    %1715 = vmatprep.subr.mxu0 %v600
    %1716 = vmatpush1.msra.mxu0 %v599
    %1717 = vmatprep.subr.mxu0 %v596
    %1718 = vmatpush1.msra.mxu0 %v595
    %1719 = vmatprep.subr.mxu0 %v592
    %1720 = vmatpush1.msra.mxu0 %v591
    %1721 = vmatprep.subr.mxu0 %v588
    %1722 = vmatpush1.msra.mxu0 %v587
    %1723 = vmatprep.subr.mxu0 %v584
    %1724 = vmatpush1.msra.mxu0 %v583
    %1725 = vmatprep.subr.mxu0 %v580
    %1726 = vmatpush1.msra.mxu0 %v579
    %1727 = vmatprep.subr.mxu0 %v576
    %1728 = vmatpush1.msra.mxu0 %v575
    %1729 = vmatprep.subr.mxu0 %v572
    %1730 = vmatpush1.msra.mxu0 %v571
    %1731 = vmatprep.subr.mxu0 %v568
    %1732 = vmatpush1.msra.mxu0 %v567
    %1733 = vmatprep.subr.mxu0 %v564
    %1734 = vmatpush1.msra.mxu0 %v563
    %1735 = vmatprep.subr.mxu0 %v560
    %1736 = vmatpush1.msra.mxu0 %v559
    %1737 = vmatprep.subr.mxu0 0.0
    %1738 = vmatpush2.msra.mxu0 0.0
    %1739 = vmatprep.subr.mxu0 0.0
    %1740 = vmatpush2.msra.mxu0 0.0
    %1741 = vmatprep.subr.mxu0 0.0
    %1742 = vmatpush2.msra.mxu0 0.0
    %1743 = vmatprep.subr.mxu0 0.0
    %1744 = vmatpush2.msra.mxu0 0.0
    %1745 = vmatprep.subr.mxu0 0.0
    %1746 = vmatpush2.msra.mxu0 0.0
    %1747 = vmatprep.subr.mxu0 0.0
    %1748 = vmatpush2.msra.mxu0 0.0
    %1749 = vmatprep.subr.mxu0 0.0
    %1750 = vmatpush2.msra.mxu0 0.0
    %1751 = vmatprep.subr.mxu0 0.0
    %1752 = vmatpush2.msra.mxu0 0.0
    %1753 = vmatprep.subr.mxu0 0.0
    %1754 = vmatpush2.msra.mxu0 0.0
    %1755 = vmatprep.subr.mxu0 0.0
    %1756 = vmatpush2.msra.mxu0 0.0
    %1757 = vmatprep.subr.mxu0 0.0
    %1758 = vmatpush2.msra.mxu0 0.0
    %1759 = vmatprep.subr.mxu0 0.0
    %1760 = vmatpush2.msra.mxu0 0.0
    %1761 = vmatprep.subr.mxu0 0.0
    %1762 = vmatpush2.msra.mxu0 0.0
    %1763 = vmatprep.subr.mxu0 0.0
    %1764 = vmatpush2.msra.mxu0 0.0
    %1765 = vmatprep.subr.mxu0 0.0
    %1766 = vmatpush2.msra.mxu0 0.0
    %1767 = vmatprep.subr.mxu0 0.0
    %1768 = vmatpush2.msra.mxu0 0.0
    %1769 = vmatprep.mubr.f32.mxu0 0.0
    %1770 = vmatmul.mubr.f32.gmra.mxu0 %v1695
    %v1771 = vpop.f32.mrf.mxu0
    %v1772 = vadd.f32 0.0, %v1771
    %v1773 = vpop.f32.mrf.mxu0
    %v1774 = vadd.f32 0.0, %v1773
    %1775 = vdwg.mxu0
    %1776 = vmatprep.subr.mxu0 %v622
    %1777 = vmatpush1.msra.mxu0 %v621
    %1778 = vmatprep.subr.mxu0 %v618
    %1779 = vmatpush1.msra.mxu0 %v617
    %1780 = vmatprep.subr.mxu0 %v614
    %1781 = vmatpush1.msra.mxu0 %v613
    %1782 = vmatprep.subr.mxu0 %v610
    %1783 = vmatpush1.msra.mxu0 %v609
    %1784 = vmatprep.subr.mxu0 %v606
    %1785 = vmatpush1.msra.mxu0 %v605
    %1786 = vmatprep.subr.mxu0 %v602
    %1787 = vmatpush1.msra.mxu0 %v601
    %1788 = vmatprep.subr.mxu0 %v598
    %1789 = vmatpush1.msra.mxu0 %v597
    %1790 = vmatprep.subr.mxu0 %v594
    %1791 = vmatpush1.msra.mxu0 %v593
    %1792 = vmatprep.subr.mxu0 %v590
    %1793 = vmatpush1.msra.mxu0 %v589
    %1794 = vmatprep.subr.mxu0 %v586
    %1795 = vmatpush1.msra.mxu0 %v585
    %1796 = vmatprep.subr.mxu0 %v582
    %1797 = vmatpush1.msra.mxu0 %v581
    %1798 = vmatprep.subr.mxu0 %v578
    %1799 = vmatpush1.msra.mxu0 %v577
    %1800 = vmatprep.subr.mxu0 %v574
    %1801 = vmatpush1.msra.mxu0 %v573
    %1802 = vmatprep.subr.mxu0 %v570
    %1803 = vmatpush1.msra.mxu0 %v569
    %1804 = vmatprep.subr.mxu0 %v566
    %1805 = vmatpush1.msra.mxu0 %v565
    %1806 = vmatprep.subr.mxu0 %v562
    %1807 = vmatpush1.msra.mxu0 %v561
    %1808 = vmatprep.subr.mxu0 0.0
    %1809 = vmatpush2.msra.mxu0 0.0
    %1810 = vmatprep.subr.mxu0 0.0
    %1811 = vmatpush2.msra.mxu0 0.0
    %1812 = vmatprep.subr.mxu0 0.0
    %1813 = vmatpush2.msra.mxu0 0.0
    %1814 = vmatprep.subr.mxu0 0.0
    %1815 = vmatpush2.msra.mxu0 0.0
    %1816 = vmatprep.subr.mxu0 0.0
    %1817 = vmatpush2.msra.mxu0 0.0
    %1818 = vmatprep.subr.mxu0 0.0
    %1819 = vmatpush2.msra.mxu0 0.0
    %1820 = vmatprep.subr.mxu0 0.0
    %1821 = vmatpush2.msra.mxu0 0.0
    %1822 = vmatprep.subr.mxu0 0.0
    %1823 = vmatpush2.msra.mxu0 0.0
    %1824 = vmatprep.subr.mxu0 0.0
    %1825 = vmatpush2.msra.mxu0 0.0
    %1826 = vmatprep.subr.mxu0 0.0
    %1827 = vmatpush2.msra.mxu0 0.0
    %1828 = vmatprep.subr.mxu0 0.0
    %1829 = vmatpush2.msra.mxu0 0.0
    %1830 = vmatprep.subr.mxu0 0.0
    %1831 = vmatpush2.msra.mxu0 0.0
    %1832 = vmatprep.subr.mxu0 0.0
    %1833 = vmatpush2.msra.mxu0 0.0
    %1834 = vmatprep.subr.mxu0 0.0
    %1835 = vmatpush2.msra.mxu0 0.0
    %1836 = vmatprep.subr.mxu0 0.0
    %1837 = vmatpush2.msra.mxu0 0.0
    %1838 = vmatprep.subr.mxu0 0.0
    %1839 = vmatpush2.msra.mxu0 0.0
    %1840 = vmatprep.mubr.f32.mxu0 0.0
    %1841 = vmatmul.mubr.f32.gmra.mxu0 %v1695
    %v1842 = vpop.f32.mrf.mxu0
    %v1843 = vadd.f32 0.0, %v1842
    %v1844 = vpop.f32.mrf.mxu0
    %v1845 = vadd.f32 0.0, %v1844
    %1846 = vdwg.mxu0
    %v1847 = vadd.f32 %v1701, %v1772
    %v1848 = vadd.f32 %v1702, %v1774
    %v1849 = vadd.f32 %v1703, %v1843
    %v1850 = vadd.f32 %v1704, %v1845
    %v1851 = vxor.u32 %v1847, 2147483648
    %v1852 = vmul.f32 %v1851, 1.442695
    %v1853 = vpow.pop %v1852
    %v1854 = vadd.f32 %v1853, 1.0
    %v1855 = vrcp.pop %v1854
    %v1856 = vmul.f32 1.0, %v1855
    %v1857 = vxor.u32 %v1848, 2147483648
    %v1858 = vmul.f32 %v1857, 1.442695
    %v1859 = vpow.pop %v1858
    %v1860 = vadd.f32 %v1859, 1.0
    %v1861 = vrcp.pop %v1860
    %v1862 = vmul.f32 1.0, %v1861
    %v1863 = vtanh.pop %v1849
    %v1864 = vxor.u32 %v1850, 2147483648
    %v1865 = vmul.f32 %v1864, 1.442695
    %v1866 = vpow.pop %v1865
    %v1867 = vadd.f32 %v1866, 1.0
    %v1868 = vrcp.pop %v1867
    %v1869 = vmul.f32 1.0, %v1868
    %v1870 = vmul.f32 %v1862, %v1693
    %v1871 = vmul.f32 %v1856, %v1863
    %v1872 = vadd.f32 %v1870, %v1871
    %v1873 = vtanh.pop %v1872
    %v1874 = vmul.f32 %v1869, %v1873
    %s1875 = scalar_lea.vmem [#allocation3], 48
    %1876 = vst [vmem:[%s1875] sm:$0xff] %v1874
    %s1877 = smul.u32 7, 4
    %s1878 = smul.addr %s1877, 8
    %s1879 = scalar_lea.vmem [#allocation2], %s1878
    %v1880 = vld [vmem:[%s1879] sm:$0xff]
    %v1881 = vld [vmem:[%s1879 + $0x8] sm:$0xff]
    %v1882 = vld [vmem:[%s1879 + $0x10] sm:$0xff]
    %v1883 = vld [vmem:[%s1879 + $0x18] sm:$0xff]
    %1884 = vmatprep.subr.mxu0 %v620
    %1885 = vmatpush1.msra.mxu0 %v619
    %1886 = vmatprep.subr.mxu0 %v616
    %1887 = vmatpush1.msra.mxu0 %v615
    %1888 = vmatprep.subr.mxu0 %v612
    %1889 = vmatpush1.msra.mxu0 %v611
    %1890 = vmatprep.subr.mxu0 %v608
    %1891 = vmatpush1.msra.mxu0 %v607
    %1892 = vmatprep.subr.mxu0 %v604
    %1893 = vmatpush1.msra.mxu0 %v603
    %1894 = vmatprep.subr.mxu0 %v600
    %1895 = vmatpush1.msra.mxu0 %v599
    %1896 = vmatprep.subr.mxu0 %v596
    %1897 = vmatpush1.msra.mxu0 %v595
    %1898 = vmatprep.subr.mxu0 %v592
    %1899 = vmatpush1.msra.mxu0 %v591
    %1900 = vmatprep.subr.mxu0 %v588
    %1901 = vmatpush1.msra.mxu0 %v587
    %1902 = vmatprep.subr.mxu0 %v584
    %1903 = vmatpush1.msra.mxu0 %v583
    %1904 = vmatprep.subr.mxu0 %v580
    %1905 = vmatpush1.msra.mxu0 %v579
    %1906 = vmatprep.subr.mxu0 %v576
    %1907 = vmatpush1.msra.mxu0 %v575
    %1908 = vmatprep.subr.mxu0 %v572
    %1909 = vmatpush1.msra.mxu0 %v571
    %1910 = vmatprep.subr.mxu0 %v568
    %1911 = vmatpush1.msra.mxu0 %v567
    %1912 = vmatprep.subr.mxu0 %v564
    %1913 = vmatpush1.msra.mxu0 %v563
    %1914 = vmatprep.subr.mxu0 %v560
    %1915 = vmatpush1.msra.mxu0 %v559
    %1916 = vmatprep.subr.mxu0 0.0
    %1917 = vmatpush2.msra.mxu0 0.0
    %1918 = vmatprep.subr.mxu0 0.0
    %1919 = vmatpush2.msra.mxu0 0.0
    %1920 = vmatprep.subr.mxu0 0.0
    %1921 = vmatpush2.msra.mxu0 0.0
    %1922 = vmatprep.subr.mxu0 0.0
    %1923 = vmatpush2.msra.mxu0 0.0
    %1924 = vmatprep.subr.mxu0 0.0
    %1925 = vmatpush2.msra.mxu0 0.0
    %1926 = vmatprep.subr.mxu0 0.0
    %1927 = vmatpush2.msra.mxu0 0.0
    %1928 = vmatprep.subr.mxu0 0.0
    %1929 = vmatpush2.msra.mxu0 0.0
    %1930 = vmatprep.subr.mxu0 0.0
    %1931 = vmatpush2.msra.mxu0 0.0
    %1932 = vmatprep.subr.mxu0 0.0
    %1933 = vmatpush2.msra.mxu0 0.0
    %1934 = vmatprep.subr.mxu0 0.0
    %1935 = vmatpush2.msra.mxu0 0.0
    %1936 = vmatprep.subr.mxu0 0.0
    %1937 = vmatpush2.msra.mxu0 0.0
    %1938 = vmatprep.subr.mxu0 0.0
    %1939 = vmatpush2.msra.mxu0 0.0
    %1940 = vmatprep.subr.mxu0 0.0
    %1941 = vmatpush2.msra.mxu0 0.0
    %1942 = vmatprep.subr.mxu0 0.0
    %1943 = vmatpush2.msra.mxu0 0.0
    %1944 = vmatprep.subr.mxu0 0.0
    %1945 = vmatpush2.msra.mxu0 0.0
    %1946 = vmatprep.subr.mxu0 0.0
    %1947 = vmatpush2.msra.mxu0 0.0
    %1948 = vmatprep.mubr.f32.mxu0 0.0
    %1949 = vmatmul.mubr.f32.gmra.mxu0 %v1874
    %v1950 = vpop.f32.mrf.mxu0
    %v1951 = vadd.f32 0.0, %v1950
    %v1952 = vpop.f32.mrf.mxu0
    %v1953 = vadd.f32 0.0, %v1952
    %1954 = vdwg.mxu0
    %1955 = vmatprep.subr.mxu0 %v622
    %1956 = vmatpush1.msra.mxu0 %v621
    %1957 = vmatprep.subr.mxu0 %v618
    %1958 = vmatpush1.msra.mxu0 %v617
    %1959 = vmatprep.subr.mxu0 %v614
    %1960 = vmatpush1.msra.mxu0 %v613
    %1961 = vmatprep.subr.mxu0 %v610
    %1962 = vmatpush1.msra.mxu0 %v609
    %1963 = vmatprep.subr.mxu0 %v606
    %1964 = vmatpush1.msra.mxu0 %v605
    %1965 = vmatprep.subr.mxu0 %v602
    %1966 = vmatpush1.msra.mxu0 %v601
    %1967 = vmatprep.subr.mxu0 %v598
    %1968 = vmatpush1.msra.mxu0 %v597
    %1969 = vmatprep.subr.mxu0 %v594
    %1970 = vmatpush1.msra.mxu0 %v593
    %1971 = vmatprep.subr.mxu0 %v590
    %1972 = vmatpush1.msra.mxu0 %v589
    %1973 = vmatprep.subr.mxu0 %v586
    %1974 = vmatpush1.msra.mxu0 %v585
    %1975 = vmatprep.subr.mxu0 %v582
    %1976 = vmatpush1.msra.mxu0 %v581
    %1977 = vmatprep.subr.mxu0 %v578
    %1978 = vmatpush1.msra.mxu0 %v577
    %1979 = vmatprep.subr.mxu0 %v574
    %1980 = vmatpush1.msra.mxu0 %v573
    %1981 = vmatprep.subr.mxu0 %v570
    %1982 = vmatpush1.msra.mxu0 %v569
    %1983 = vmatprep.subr.mxu0 %v566
    %1984 = vmatpush1.msra.mxu0 %v565
    %1985 = vmatprep.subr.mxu0 %v562
    %1986 = vmatpush1.msra.mxu0 %v561
    %1987 = vmatprep.subr.mxu0 0.0
    %1988 = vmatpush2.msra.mxu0 0.0
    %1989 = vmatprep.subr.mxu0 0.0
    %1990 = vmatpush2.msra.mxu0 0.0
    %1991 = vmatprep.subr.mxu0 0.0
    %1992 = vmatpush2.msra.mxu0 0.0
    %1993 = vmatprep.subr.mxu0 0.0
    %1994 = vmatpush2.msra.mxu0 0.0
    %1995 = vmatprep.subr.mxu0 0.0
    %1996 = vmatpush2.msra.mxu0 0.0
    %1997 = vmatprep.subr.mxu0 0.0
    %1998 = vmatpush2.msra.mxu0 0.0
    %1999 = vmatprep.subr.mxu0 0.0
    %2000 = vmatpush2.msra.mxu0 0.0
    %2001 = vmatprep.subr.mxu0 0.0
    %2002 = vmatpush2.msra.mxu0 0.0
    %2003 = vmatprep.subr.mxu0 0.0
    %2004 = vmatpush2.msra.mxu0 0.0
    %2005 = vmatprep.subr.mxu0 0.0
    %2006 = vmatpush2.msra.mxu0 0.0
    %2007 = vmatprep.subr.mxu0 0.0
    %2008 = vmatpush2.msra.mxu0 0.0
    %2009 = vmatprep.subr.mxu0 0.0
    %2010 = vmatpush2.msra.mxu0 0.0
    %2011 = vmatprep.subr.mxu0 0.0
    %2012 = vmatpush2.msra.mxu0 0.0
    %2013 = vmatprep.subr.mxu0 0.0
    %2014 = vmatpush2.msra.mxu0 0.0
    %2015 = vmatprep.subr.mxu0 0.0
    %2016 = vmatpush2.msra.mxu0 0.0
    %2017 = vmatprep.subr.mxu0 0.0
    %2018 = vmatpush2.msra.mxu0 0.0
    %2019 = vmatprep.mubr.f32.mxu0 0.0
    %2020 = vmatmul.mubr.f32.gmra.mxu0 %v1874
    %v2021 = vpop.f32.mrf.mxu0
    %v2022 = vadd.f32 0.0, %v2021
    %v2023 = vpop.f32.mrf.mxu0
    %v2024 = vadd.f32 0.0, %v2023
    %2025 = vdwg.mxu0
    %v2026 = vadd.f32 %v1880, %v1951
    %v2027 = vadd.f32 %v1881, %v1953
    %v2028 = vadd.f32 %v1882, %v2022
    %v2029 = vadd.f32 %v1883, %v2024
    %v2030 = vxor.u32 %v2026, 2147483648
    %v2031 = vmul.f32 %v2030, 1.442695
    %v2032 = vpow.pop %v2031
    %v2033 = vadd.f32 %v2032, 1.0
    %v2034 = vrcp.pop %v2033
    %v2035 = vmul.f32 1.0, %v2034
    %v2036 = vxor.u32 %v2027, 2147483648
    %v2037 = vmul.f32 %v2036, 1.442695
    %v2038 = vpow.pop %v2037
    %v2039 = vadd.f32 %v2038, 1.0
    %v2040 = vrcp.pop %v2039
    %v2041 = vmul.f32 1.0, %v2040
    %v2042 = vtanh.pop %v2028
    %v2043 = vxor.u32 %v2029, 2147483648
    %v2044 = vmul.f32 %v2043, 1.442695
    %v2045 = vpow.pop %v2044
    %v2046 = vadd.f32 %v2045, 1.0
    %v2047 = vrcp.pop %v2046
    %v2048 = vmul.f32 1.0, %v2047
    %v2049 = vmul.f32 %v2041, %v1872
    %v2050 = vmul.f32 %v2035, %v2042
    %v2051 = vadd.f32 %v2049, %v2050
    %v2052 = vtanh.pop %v2051
    %v2053 = vmul.f32 %v2048, %v2052
    %s2054 = scalar_lea.vmem [#allocation3], 56
    %2055 = vst [vmem:[%s2054] sm:$0xff] %v2053
    %2056 = vst [vmem:[%s11] sm:$0xff] %v2053
    %2057 = vst [vmem:[%s12] sm:$0xff] %v2051
    %v2058 = vld [vmem:[#allocation3] sm:$0xff]
    %v2059 = vld [vmem:[#allocation3 + $0x8] sm:$0xff]
    %v2060 = vld [vmem:[#allocation3 + $0x10] sm:$0xff]
    %v2061 = vld [vmem:[#allocation3 + $0x18] sm:$0xff]
    %v2062 = vld [vmem:[#allocation3 + $0x20] sm:$0xff]
    %v2063 = vld [vmem:[#allocation3 + $0x28] sm:$0xff]
    %v2064 = vld [vmem:[#allocation3 + $0x30] sm:$0xff]
    %v2065 = vld [vmem:[#allocation3 + $0x38] sm:$0xff]
    %v2066 = vld [vmem:[%s6] sm:$0xff]
    %v2067 = vld [vmem:[%s6 + $0x8] sm:$0xff]
    %v2068 = vld [vmem:[%s6 + $0x10] sm:$0xff]
    %v2069 = vld [vmem:[%s6 + $0x18] sm:$0xff]
    %v2070 = vld [vmem:[%s6 + $0x20] sm:$0xff]
    %v2071 = vld [vmem:[%s6 + $0x28] sm:$0xff]
    %v2072 = vld [vmem:[%s6 + $0x30] sm:$0xff]
    %v2073 = vld [vmem:[%s6 + $0x38] sm:$0xff]
    %v2074 = vld [vmem:[%s6 + $0x40] sm:$0xff]
    %v2075 = vld [vmem:[%s6 + $0x48] sm:$0xff]
    %v2076 = vld [vmem:[%s6 + $0x50] sm:$0xff]
    %v2077 = vld [vmem:[%s6 + $0x58] sm:$0xff]
    %v2078 = vld [vmem:[%s6 + $0x60] sm:$0xff]
    %v2079 = vld [vmem:[%s6 + $0x68] sm:$0xff]
    %v2080 = vld [vmem:[%s6 + $0x70] sm:$0xff]
    %v2081 = vld [vmem:[%s6 + $0x78] sm:$0xff]
    %v2082 = vld [vmem:[%s7] sm:$0x1]
    %v2084 = vlaneseq
    %v2085 = vshrl.u32 %v2084, 7
    %v2086 = vsub.s32 0, %v2085
    %v2087 = vrot.slane %v2082, %v2086
    %2089 = vmatprep.subr.mxu0 0.0
    %2090 = vmatpush1.msra.mxu0 %v2081
    %2091 = vmatprep.subr.mxu0 0.0
    %2092 = vmatpush1.msra.mxu0 %v2080
    %2093 = vmatprep.subr.mxu0 0.0
    %2094 = vmatpush1.msra.mxu0 %v2079
    %2095 = vmatprep.subr.mxu0 0.0
    %2096 = vmatpush1.msra.mxu0 %v2078
    %2097 = vmatprep.subr.mxu0 0.0
    %2098 = vmatpush1.msra.mxu0 %v2077
    %2099 = vmatprep.subr.mxu0 0.0
    %2100 = vmatpush1.msra.mxu0 %v2076
    %2101 = vmatprep.subr.mxu0 0.0
    %2102 = vmatpush1.msra.mxu0 %v2075
    %2103 = vmatprep.subr.mxu0 0.0
    %2104 = vmatpush1.msra.mxu0 %v2074
    %2105 = vmatprep.subr.mxu0 0.0
    %2106 = vmatpush1.msra.mxu0 %v2073
    %2107 = vmatprep.subr.mxu0 0.0
    %2108 = vmatpush1.msra.mxu0 %v2072
    %2109 = vmatprep.subr.mxu0 0.0
    %2110 = vmatpush1.msra.mxu0 %v2071
    %2111 = vmatprep.subr.mxu0 0.0
    %2112 = vmatpush1.msra.mxu0 %v2070
    %2113 = vmatprep.subr.mxu0 0.0
    %2114 = vmatpush1.msra.mxu0 %v2069
    %2115 = vmatprep.subr.mxu0 0.0
    %2116 = vmatpush1.msra.mxu0 %v2068
    %2117 = vmatprep.subr.mxu0 0.0
    %2118 = vmatpush1.msra.mxu0 %v2067
    %2119 = vmatprep.subr.mxu0 0.0
    %2120 = vmatpush1.msra.mxu0 %v2066
    %2121 = vmatprep.subr.mxu0 0.0
    %2122 = vmatpush2.msra.mxu0 0.0
    %2123 = vmatprep.subr.mxu0 0.0
    %2124 = vmatpush2.msra.mxu0 0.0
    %2125 = vmatprep.subr.mxu0 0.0
    %2126 = vmatpush2.msra.mxu0 0.0
    %2127 = vmatprep.subr.mxu0 0.0
    %2128 = vmatpush2.msra.mxu0 0.0
    %2129 = vmatprep.subr.mxu0 0.0
    %2130 = vmatpush2.msra.mxu0 0.0
    %2131 = vmatprep.subr.mxu0 0.0
    %2132 = vmatpush2.msra.mxu0 0.0
    %2133 = vmatprep.subr.mxu0 0.0
    %2134 = vmatpush2.msra.mxu0 0.0
    %2135 = vmatprep.subr.mxu0 0.0
    %2136 = vmatpush2.msra.mxu0 0.0
    %2137 = vmatprep.subr.mxu0 0.0
    %2138 = vmatpush2.msra.mxu0 0.0
    %2139 = vmatprep.subr.mxu0 0.0
    %2140 = vmatpush2.msra.mxu0 0.0
    %2141 = vmatprep.subr.mxu0 0.0
    %2142 = vmatpush2.msra.mxu0 0.0
    %2143 = vmatprep.subr.mxu0 0.0
    %2144 = vmatpush2.msra.mxu0 0.0
    %2145 = vmatprep.subr.mxu0 0.0
    %2146 = vmatpush2.msra.mxu0 0.0
    %2147 = vmatprep.subr.mxu0 0.0
    %2148 = vmatpush2.msra.mxu0 0.0
    %2149 = vmatprep.subr.mxu0 0.0
    %2150 = vmatpush2.msra.mxu0 0.0
    %2151 = vmatprep.subr.mxu0 0.0
    %2152 = vmatpush2.msra.mxu0 0.0
    %2153 = vmatprep.mubr.f32.mxu0 0.0
    %2154 = vmatmul.mubr.f32.gmra.mxu0 %v2058
    %v2155 = vpop.f32.mrf.mxu0
    %v2156 = vadd.f32 %v2087, %v2155
    %v2157 = vpop.f32.mrf.mxu0
    %2158 = vmatprep.mubr.f32.mxu0 0.0
    %2159 = vmatmul.mubr.f32.gmra.mxu0 %v2059
    %v2160 = vpop.f32.mrf.mxu0
    %v2161 = vadd.f32 %v2087, %v2160
    %v2162 = vpop.f32.mrf.mxu0
    %2163 = vmatprep.mubr.f32.mxu0 0.0
    %2164 = vmatmul.mubr.f32.gmra.mxu0 %v2060
    %v2165 = vpop.f32.mrf.mxu0
    %v2166 = vadd.f32 %v2087, %v2165
    %v2167 = vpop.f32.mrf.mxu0
    %2168 = vmatprep.mubr.f32.mxu0 0.0
    %2169 = vmatmul.mubr.f32.gmra.mxu0 %v2061
    %v2170 = vpop.f32.mrf.mxu0
    %v2171 = vadd.f32 %v2087, %v2170
    %v2172 = vpop.f32.mrf.mxu0
    %2173 = vmatprep.mubr.f32.mxu0 0.0
    %2174 = vmatmul.mubr.f32.gmra.mxu0 %v2062
    %v2175 = vpop.f32.mrf.mxu0
    %v2176 = vadd.f32 %v2087, %v2175
    %v2177 = vpop.f32.mrf.mxu0
    %2178 = vmatprep.mubr.f32.mxu0 0.0
    %2179 = vmatmul.mubr.f32.gmra.mxu0 %v2063
    %v2180 = vpop.f32.mrf.mxu0
    %v2181 = vadd.f32 %v2087, %v2180
    %v2182 = vpop.f32.mrf.mxu0
    %2183 = vmatprep.mubr.f32.mxu0 0.0
    %2184 = vmatmul.mubr.f32.gmra.mxu0 %v2064
    %v2185 = vpop.f32.mrf.mxu0
    %v2186 = vadd.f32 %v2087, %v2185
    %v2187 = vpop.f32.mrf.mxu0
    %2188 = vmatprep.mubr.f32.mxu0 0.0
    %2189 = vmatmul.mubr.f32.gmra.mxu0 %v2065
    %v2190 = vpop.f32.mrf.mxu0
    %v2191 = vadd.f32 %v2087, %v2190
    %v2192 = vpop.f32.mrf.mxu0
    %2193 = vdwg.mxu0
    %2194 = vst [vmem:[%s10] sm:$0xff] %v2156
    %2195 = vst [vmem:[%s10 + $0x8] sm:$0xff] %v2161
    %2196 = vst [vmem:[%s10 + $0x10] sm:$0xff] %v2166
    %2197 = vst [vmem:[%s10 + $0x18] sm:$0xff] %v2171
    %2198 = vst [vmem:[%s10 + $0x20] sm:$0xff] %v2176
    %2199 = vst [vmem:[%s10 + $0x28] sm:$0xff] %v2181
    %2200 = vst [vmem:[%s10 + $0x30] sm:$0xff] %v2186
    %2201 = vst [vmem:[%s10 + $0x38] sm:$0xff] %v2191
    // Predicated region
    $region50: #{rdqn_forward.1} parent=1 // pred_check
      _
    $region51: #{rdqn_forward.1} parent=1 // pred_check_branch
      %2203 = sbr.rel (0) target = $region53
    $region52: #{rdqn_forward.1} parent=1 // pred_region
      _
    $region53: #{rdqn_forward.1} parent=1 // pred_fallthru
      _
    // Predicated region
    $region54: #{rdqn_forward.1} parent=1 // pred_check
      _
    $region55: #{rdqn_forward.1} parent=1 // pred_check_branch
      %2205 = sbr.rel (0) target = $region57
    $region56: #{rdqn_forward.1} parent=1 // pred_region
      _
    $region57: #{rdqn_forward.1} parent=1 // pred_fallthru
      _
    // Predicated region
    $region58: #{rdqn_forward.1} parent=1 // pred_check
      _
    $region59: #{rdqn_forward.1} parent=1 // pred_check_branch
      %2207 = sbr.rel (0) target = $region61
    $region60: #{rdqn_forward.1} parent=1 // pred_region
      _
    $region61: #{rdqn_forward.1} parent=1 // pred_fallthru
      _
    // Predicated region
    $region62: #{rdqn_forward.1} parent=1 // pred_check
      _
    $region63: #{rdqn_forward.1} parent=1 // pred_check_branch
      %2209 = sbr.rel (0) target = $region65
    $region64: #{rdqn_forward.1} parent=1 // pred_region
      _
    $region65: #{rdqn_forward.1} parent=1 // pred_fallthru
      _
    // Predicated region
    $region66: #{rdqn_forward.1} parent=1 // pred_check
      _
    $region67: #{rdqn_forward.1} parent=1 // pred_check_branch
      %2211 = sbr.rel (0) target = $region69
    $region68: #{rdqn_forward.1} parent=1 // pred_region
      _
    $region69: #{rdqn_forward.1} parent=1 // pred_fallthru
      _
    // Predicated region
    $region70: #{rdqn_forward.1} parent=1 // pred_check
      _
    $region71: #{rdqn_forward.1} parent=1 // pred_check_branch
      %2213 = sbr.rel (0) target = $region73
    $region72: #{rdqn_forward.1} parent=1 // pred_region
      _
    $region73: #{rdqn_forward.1} parent=1 // pred_fallthru
      _
    %2214 = vsyncpa [#allocation5], 1

</llo_original>
